<compile_context>
chip_gen: v7x
topology: tpu7x:2x2x1
jax: 0.10.0
libtpu: 0.0.40
codegen_flags: <defaults>
</compile_context>

<pallas_src>
import functools

import jax
import jax.numpy as jnp
from jax.experimental import pallas as pl
from jax.experimental.pallas import tpu as pltpu


def soft_q_kernel(xa_ref,
                  w1_ref, b1_ref,
                  w2_ref, b2_ref,
                  w3_ref, b3_ref,
                  w4_ref, b4_ref,
                  out_ref):
    # Layer 1: single K=obs+act matmul (bf16 MXU, f32 accum).
    xa = xa_ref[...].astype(jnp.bfloat16)                       # (TB, D_in)
    h = jnp.dot(xa, w1_ref[...],
                preferred_element_type=jnp.float32) + b1_ref[...]
    h = jnp.maximum(h, 0.0)                                      # (TB, 256) f32

    # Layer 2
    h = jnp.dot(h.astype(jnp.bfloat16), w2_ref[...],
                preferred_element_type=jnp.float32) + b2_ref[...]
    h = jnp.maximum(h, 0.0)

    # Layer 3
    h = jnp.dot(h.astype(jnp.bfloat16), w3_ref[...],
                preferred_element_type=jnp.float32) + b3_ref[...]
    h = jnp.maximum(h, 0.0)

    # Layer 4 (256 -> 1): VPU multiply + lane reduction, bias from SMEM.
    q = jnp.sum(h * w4_ref[...], axis=-1, keepdims=True) + b4_ref[0]   # (TB, 1)
    # Lane-dense store: (TB, 1) -> (1, TB) relayout (XLU), write as (1, 1, TB).
    out_ref[...] = q.T.reshape(1, 1, -1).astype(out_ref.dtype)


def prepare_params(params):
    """One-time param conversion: transpose to (in, out), cast weights to bf16.

    Done once at parameter creation/update time, NOT per forward call.
    """
    (w1, b1), (w2, b2), (w3, b3), (w4, b4) = params
    return {
        "w1": jnp.asarray(w1).T.astype(jnp.bfloat16),            # (obs+act, 256)
        "b1": jnp.asarray(b1).reshape(1, -1).astype(jnp.float32),
        "w2": jnp.asarray(w2).T.astype(jnp.bfloat16),            # (256, 256)
        "b2": jnp.asarray(b2).reshape(1, -1).astype(jnp.float32),
        "w3": jnp.asarray(w3).T.astype(jnp.bfloat16),            # (256, 256)
        "b3": jnp.asarray(b3).reshape(1, -1).astype(jnp.float32),
        "w4": jnp.asarray(w4).reshape(1, -1).astype(jnp.float32),  # (1, 256) f32
        "b4": jnp.asarray(b4).reshape(1).astype(jnp.float32),      # (1,) -> SMEM
    }


def _round_up(n, m):
    return ((n + m - 1) // m) * m


@functools.partial(jax.jit, static_argnames=("block_b",))
def soft_q_forward(x, a, prep, block_b=256):
    """x: (B, obs_dim) f32, a: (B, act_dim) f32. Returns (B, 1) f32 Q-values."""
    B = x.shape[0]
    xa = jnp.concatenate([x, a], axis=1)          # tiny (B, obs+act) concat
    d_in = xa.shape[1]
    H = prep["w2"].shape[0]

    # Batch tile: multiple of 128 (lane-dense output), capped by block_b, and
    # capped near B/2 so the "parallel" axis spans >= 2 tiles (v7x dual-TC).
    tb = min(block_b, _round_up(B, 128))
    if B > 128:
        tb = min(tb, _round_up(-(-B // 2), 128))
    tb = max(128, _round_up(tb, 128))
    b_pad = _round_up(B, tb)                      # pad instead of tb=B fallback
    n_tiles = b_pad // tb

    if b_pad != B:
        xa = jnp.pad(xa, ((0, b_pad - B), (0, 0)))

    def resident(shape):     # weights / biases: same block every step -> VMEM-resident
        return pl.BlockSpec(shape, lambda i, _s=shape: (0,) * len(_s))

    out = pl.pallas_call(
        soft_q_kernel,
        out_shape=jax.ShapeDtypeStruct((n_tiles, 1, tb), jnp.float32),
        grid=(n_tiles,),
        in_specs=[
            pl.BlockSpec((tb, d_in), lambda i: (i, 0)),          # activations
            resident((d_in, H)),
            resident((1, H)),
            resident((H, H)),
            resident((1, H)),
            resident((H, H)),
            resident((1, H)),
            resident((1, H)),                                    # w4 (1, 256) f32
            pl.BlockSpec(memory_space=pltpu.MemorySpace.SMEM),   # b4 scalar
        ],
        out_specs=pl.BlockSpec((1, 1, tb), lambda i: (i, 0, 0)),  # lane-dense
        compiler_params=pltpu.CompilerParams(
            dimension_semantics=("parallel",)),
    )(xa,
      prep["w1"], prep["b1"],
      prep["w2"], prep["b2"],
      prep["w3"], prep["b3"],
      prep["w4"], prep["b4"])

    # (n_tiles, 1, tb) -> (B, 1), dropping padded rows.
    return out.reshape(b_pad, 1)[:B]


def init_linear(key, in_features, out_features):
    """PyTorch nn.Linear default init: U(-1/sqrt(fan_in), 1/sqrt(fan_in))."""
    kw, kb = jax.random.split(key)
    bound = 1.0 / jnp.sqrt(jnp.float32(in_features))
    w = jax.random.uniform(kw, (out_features, in_features), jnp.float32,
                           minval=-bound, maxval=bound)
    b = jax.random.uniform(kb, (out_features,), jnp.float32,
                           minval=-bound, maxval=bound)
    return w, b


def reference_forward(x, a, prep):
    """Pure-JAX reference with the same numerics (bf16 weights, f32 accum)."""
    xa = jnp.concatenate([x, a], axis=1).astype(jnp.bfloat16)
    h = jnp.dot(xa, prep["w1"], preferred_element_type=jnp.float32) + prep["b1"]
    h = jnp.maximum(h, 0.0)
    h = jnp.dot(h.astype(jnp.bfloat16), prep["w2"],
                preferred_element_type=jnp.float32) + prep["b2"]
    h = jnp.maximum(h, 0.0)
    h = jnp.dot(h.astype(jnp.bfloat16), prep["w3"],
                preferred_element_type=jnp.float32) + prep["b3"]
    h = jnp.maximum(h, 0.0)
    return jnp.sum(h * prep["w4"], axis=-1, keepdims=True) + prep["b4"][0]


if __name__ == "__main__":
    key = jax.random.PRNGKey(0)
    OBS_DIM, ACT_DIM, BATCH, HIDDEN = 32, 8, 256, 256
    D_IN = OBS_DIM + ACT_DIM

    k_x, k_a, k1, k2, k3, k4 = jax.random.split(key, 6)
    x = jax.random.normal(k_x, (BATCH, OBS_DIM), jnp.float32)
    a = jax.random.normal(k_a, (BATCH, ACT_DIM), jnp.float32)

    params = (
        init_linear(k1, D_IN, HIDDEN),
        init_linear(k2, HIDDEN, HIDDEN),
        init_linear(k3, HIDDEN, HIDDEN),
        init_linear(k4, HIDDEN, 1),
    )
    prep = prepare_params(params)   # one-time: transpose/cast

    q = soft_q_forward(x, a, prep, block_b=256)
    q = jax.block_until_ready(q)

    q_ref = reference_forward(x, a, prep)
    assert q.shape == (BATCH, 1), q.shape
    # NOTE: bf16 weights/activations => O(1e-3) relative error vs f32 PyTorch.
    assert jnp.allclose(q, q_ref, atol=2e-3, rtol=2e-3), (
        float(jnp.max(jnp.abs(q - q_ref))))

    print("KERNEL_OK")
</pallas_src>

<mosaic_0001>
module attributes {stable_mosaic.version = 11 : i64} {
  func.func @soft_q_kernel(%arg0: i32, %arg1: memref<128x40xf32, #tpu.memory_space<vmem>>, %arg2: memref<40x256xbf16, #tpu.memory_space<vmem>>, %arg3: memref<1x256xf32, #tpu.memory_space<vmem>>, %arg4: memref<256x256xbf16, #tpu.memory_space<vmem>>, %arg5: memref<1x256xf32, #tpu.memory_space<vmem>>, %arg6: memref<256x256xbf16, #tpu.memory_space<vmem>>, %arg7: memref<1x256xf32, #tpu.memory_space<vmem>>, %arg8: memref<1x256xf32, #tpu.memory_space<vmem>>, %arg9: memref<1xf32, #tpu.memory_space<smem>>, %arg10: memref<1x1x128xf32, #tpu.memory_space<vmem>>) attributes {dimension_semantics = [#tpu.dimension_semantics<parallel>], iteration_bounds = array<i64: 2>, scalar_prefetch = 0 : i64, scratch_operands = 0 : i64, tpu.core_type = #tpu.core_type<tc>, window_params = [{transform_indices = @transform_0, window_bounds = array<i64: 128, 40>}, {pipeline_mode = #tpu.pipeline_mode<synchronous>, transform_indices = @transform_1, window_bounds = array<i64: 40, 256>}, {pipeline_mode = #tpu.pipeline_mode<synchronous>, transform_indices = @transform_2, window_bounds = array<i64: 1, 256>}, {pipeline_mode = #tpu.pipeline_mode<synchronous>, transform_indices = @transform_3, window_bounds = array<i64: 256, 256>}, {pipeline_mode = #tpu.pipeline_mode<synchronous>, transform_indices = @transform_4, window_bounds = array<i64: 1, 256>}, {pipeline_mode = #tpu.pipeline_mode<synchronous>, transform_indices = @transform_5, window_bounds = array<i64: 256, 256>}, {pipeline_mode = #tpu.pipeline_mode<synchronous>, transform_indices = @transform_6, window_bounds = array<i64: 1, 256>}, {pipeline_mode = #tpu.pipeline_mode<synchronous>, transform_indices = @transform_7, window_bounds = array<i64: 1, 256>}, {transform_indices = @transform_8, window_bounds = array<i64: 1>}, {transform_indices = @transform_9, window_bounds = array<i64: 1, 1, 128>}]} {
    %c0 = arith.constant 0 : index
    %c0_0 = arith.constant 0 : index
    %0 = vector.load %arg1[%c0, %c0_0] : memref<128x40xf32, #tpu.memory_space<vmem>>, vector<128x40xf32>
    %1 = arith.truncf %0 : vector<128x40xf32> to vector<128x40xbf16>
    %c0_1 = arith.constant 0 : index
    %c0_2 = arith.constant 0 : index
    %2 = vector.load %arg2[%c0_1, %c0_2] : memref<40x256xbf16, #tpu.memory_space<vmem>>, vector<40x256xbf16>
    %cst = arith.constant dense<0.000000e+00> : vector<128x256xf32>
    %3 = tpu.matmul %1, %2, %cst {dimension_numbers = #tpu.dot_dimension_numbers<[1], [0], [0], [1], [0, 0, 1, 1], [], []>} : vector<128x40xbf16>, vector<40x256xbf16>, vector<128x256xf32> -> vector<128x256xf32>
    %c0_3 = arith.constant 0 : index
    %c0_4 = arith.constant 0 : index
    %4 = vector.load %arg3[%c0_3, %c0_4] : memref<1x256xf32, #tpu.memory_space<vmem>>, vector<1x256xf32>
    %5 = vector.broadcast %4 : vector<1x256xf32> to vector<128x256xf32>
    %6 = arith.addf %3, %5 : vector<128x256xf32>
    %cst_5 = arith.constant 0.000000e+00 : f32
    %7 = vector.broadcast %cst_5 : f32 to vector<128x256xf32>
    %8 = arith.maximumf %6, %7 : vector<128x256xf32>
    %9 = arith.truncf %8 : vector<128x256xf32> to vector<128x256xbf16>
    %c0_6 = arith.constant 0 : index
    %c0_7 = arith.constant 0 : index
    %10 = vector.load %arg4[%c0_6, %c0_7] : memref<256x256xbf16, #tpu.memory_space<vmem>>, vector<256x256xbf16>
    %cst_8 = arith.constant dense<0.000000e+00> : vector<128x256xf32>
    %11 = tpu.matmul %9, %10, %cst_8 {dimension_numbers = #tpu.dot_dimension_numbers<[1], [0], [0], [1], [0, 0, 1, 1], [], []>} : vector<128x256xbf16>, vector<256x256xbf16>, vector<128x256xf32> -> vector<128x256xf32>
    %c0_9 = arith.constant 0 : index
    %c0_10 = arith.constant 0 : index
    %12 = vector.load %arg5[%c0_9, %c0_10] : memref<1x256xf32, #tpu.memory_space<vmem>>, vector<1x256xf32>
    %13 = vector.broadcast %12 : vector<1x256xf32> to vector<128x256xf32>
    %14 = arith.addf %11, %13 : vector<128x256xf32>
    %cst_11 = arith.constant 0.000000e+00 : f32
    %15 = vector.broadcast %cst_11 : f32 to vector<128x256xf32>
    %16 = arith.maximumf %14, %15 : vector<128x256xf32>
    %17 = arith.truncf %16 : vector<128x256xf32> to vector<128x256xbf16>
    %c0_12 = arith.constant 0 : index
    %c0_13 = arith.constant 0 : index
    %18 = vector.load %arg6[%c0_12, %c0_13] : memref<256x256xbf16, #tpu.memory_space<vmem>>, vector<256x256xbf16>
    %cst_14 = arith.constant dense<0.000000e+00> : vector<128x256xf32>
    %19 = tpu.matmul %17, %18, %cst_14 {dimension_numbers = #tpu.dot_dimension_numbers<[1], [0], [0], [1], [0, 0, 1, 1], [], []>} : vector<128x256xbf16>, vector<256x256xbf16>, vector<128x256xf32> -> vector<128x256xf32>
    %c0_15 = arith.constant 0 : index
    %c0_16 = arith.constant 0 : index
    %20 = vector.load %arg7[%c0_15, %c0_16] : memref<1x256xf32, #tpu.memory_space<vmem>>, vector<1x256xf32>
    %21 = vector.broadcast %20 : vector<1x256xf32> to vector<128x256xf32>
    %22 = arith.addf %19, %21 : vector<128x256xf32>
    %cst_17 = arith.constant 0.000000e+00 : f32
    %23 = vector.broadcast %cst_17 : f32 to vector<128x256xf32>
    %24 = arith.maximumf %22, %23 : vector<128x256xf32>
    %c0_18 = arith.constant 0 : index
    %c0_19 = arith.constant 0 : index
    %25 = vector.load %arg8[%c0_18, %c0_19] : memref<1x256xf32, #tpu.memory_space<vmem>>, vector<1x256xf32>
    %26 = vector.broadcast %25 : vector<1x256xf32> to vector<128x256xf32>
    %27 = arith.mulf %24, %26 : vector<128x256xf32>
    %cst_20 = arith.constant dense<0.000000e+00> : vector<128xf32>
    %28 = vector.multi_reduction <add>, %27, %cst_20 [1] : vector<128x256xf32> to vector<128xf32>
    %29 = vector.shape_cast %28 : vector<128xf32> to vector<128x1xf32>
    %c0_21 = arith.constant 0 : index
    %30 = memref.load %arg9[%c0_21] : memref<1xf32, #tpu.memory_space<smem>>
    %31 = vector.broadcast %30 : f32 to vector<128x1xf32>
    %32 = arith.addf %29, %31 : vector<128x1xf32>
    %33 = tpu.transpose %32, [1, 0] : vector<128x1xf32> -> vector<1x128xf32>
    %34 = vector.shape_cast %33 : vector<1x128xf32> to vector<1x1x128xf32>
    %c0_22 = arith.constant 0 : index
    %c0_23 = arith.constant 0 : index
    %c0_24 = arith.constant 0 : index
    %35 = vector.load %arg10[%c0_22, %c0_23, %c0_24] : memref<1x1x128xf32, #tpu.memory_space<vmem>>, vector<1x1x128xf32>
    tpu.vector_store %arg10[%c0_22, %c0_23, %c0_24], %34 {strides = array<i32>} : memref<1x1x128xf32, #tpu.memory_space<vmem>>, vector<1x1x128xf32>,
    return
  }
  func.func @transform_0(%arg0: i32) -> (i32, i32) {
    %c0_i32 = arith.constant 0 : i32
    %c0_i32_0 = arith.constant 0 : i32
    return %arg0, %c0_i32 : i32, i32
  }
  func.func @transform_1(%arg0: i32) -> (i32, i32) {
    %c0_i32 = arith.constant 0 : i32
    %c0_i32_0 = arith.constant 0 : i32
    %c0_i32_1 = arith.constant 0 : i32
    return %c0_i32, %c0_i32_0 : i32, i32
  }
  func.func @transform_2(%arg0: i32) -> (i32, i32) {
    %c0_i32 = arith.constant 0 : i32
    %c0_i32_0 = arith.constant 0 : i32
    %c0_i32_1 = arith.constant 0 : i32
    return %c0_i32, %c0_i32_0 : i32, i32
  }
  func.func @transform_3(%arg0: i32) -> (i32, i32) {
    %c0_i32 = arith.constant 0 : i32
    %c0_i32_0 = arith.constant 0 : i32
    %c0_i32_1 = arith.constant 0 : i32
    return %c0_i32, %c0_i32_0 : i32, i32
  }
  func.func @transform_4(%arg0: i32) -> (i32, i32) {
    %c0_i32 = arith.constant 0 : i32
    %c0_i32_0 = arith.constant 0 : i32
    %c0_i32_1 = arith.constant 0 : i32
    return %c0_i32, %c0_i32_0 : i32, i32
  }
  func.func @transform_5(%arg0: i32) -> (i32, i32) {
    %c0_i32 = arith.constant 0 : i32
    %c0_i32_0 = arith.constant 0 : i32
    %c0_i32_1 = arith.constant 0 : i32
    return %c0_i32, %c0_i32_0 : i32, i32
  }
  func.func @transform_6(%arg0: i32) -> (i32, i32) {
    %c0_i32 = arith.constant 0 : i32
    %c0_i32_0 = arith.constant 0 : i32
    %c0_i32_1 = arith.constant 0 : i32
    return %c0_i32, %c0_i32_0 : i32, i32
  }
  func.func @transform_7(%arg0: i32) -> (i32, i32) {
    %c0_i32 = arith.constant 0 : i32
    %c0_i32_0 = arith.constant 0 : i32
    %c0_i32_1 = arith.constant 0 : i32
    return %c0_i32, %c0_i32_0 : i32, i32
  }
  func.func @transform_8(%arg0: i32) -> i32 {
    %c0_i32 = arith.constant 0 : i32
    %c0_i32_0 = arith.constant 0 : i32
    return %c0_i32 : i32
  }
  func.func @transform_9(%arg0: i32) -> (i32, i32, i32) {
    %c0_i32 = arith.constant 0 : i32
    %c0_i32_0 = arith.constant 0 : i32
    %c0_i32_1 = arith.constant 0 : i32
    return %arg0, %c0_i32, %c0_i32_0 : i32, i32, i32
  }
}

</mosaic_0001>

<llo_original>
// kernel: soft_q_forward.1
$region0: #{soft_q_forward.1}
  #allocation0 [shape = 'u32[]', space=smem, size = 0x4, offset = 0x4, fixed_abs, tag = 'smem constant byte address 0x4 - core index']
  #allocation1 [shape = 'u32[144,128]{1,0:T(1,128)}', space=vmem, size = 0x12000, scoped, tag = 'internal scratch']
  #allocation2 [shape = 'f32[1]{0:T(128)S(6)}', space=smem, size = 0x200, scoped, tag = 'scoped memory for soft_q_forward.1']
  %s0 = inlined_call_operand.vmem [shape: f32[256,40], index: 0, kind: input, shape index: {}]
  %s1 = inlined_call_operand.vmem [shape: bf16[40,256], index: 1, kind: input, shape index: {}]
  %s2 = inlined_call_operand.vmem [shape: f32[1,256], index: 2, kind: input, shape index: {}]
  %s3 = inlined_call_operand.vmem [shape: bf16[256,256], index: 3, kind: input, shape index: {}]
  %s4 = inlined_call_operand.vmem [shape: f32[1,256], index: 4, kind: input, shape index: {}]
  %s5 = inlined_call_operand.hbm [shape: bf16[256,256], index: 5, kind: input, shape index: {}]
  %s6 = inlined_call_operand.vmem [shape: f32[1,256], index: 6, kind: input, shape index: {}]
  %s7 = inlined_call_operand.vmem [shape: f32[1,256], index: 7, kind: input, shape index: {}]
  %s8 = inlined_call_operand.<no memory space> [shape: f32[1], index: 8, kind: input, shape index: {}]
  %s9 = inlined_call_operand.hbm [shape: f32[2,1,128], index: 9, kind: output, shape index: {}]
  %s10 = sld [smem:[#allocation0]]
  $region73: #{soft_q_forward.1} parent=0
    _
  %s12 = ssub.s32 1, %s10
  %s13 = scalar_select 0, %s12, %s10
  %14 = sst [smem:[#allocation2]] %s8
  $region1: #{soft_q_forward.1} parent=0
    #allocation3 [shape = 'u8[131072]{0}', space=vmem, size = 0x20000, scoped, tag = 'input window, operand 5, single buffered']
    #allocation4 [shape = 's32[2]{0}', space=sflag, size = 0x8, scoped, tag = 'scoped memory for soft_q_forward.1']
    #allocation5 [shape = 's32[2]{0}', space=sflag, size = 0x8, scoped, tag = 'scoped memory for soft_q_forward.1']
    #allocation6 [shape = 'u8[1024]{0}', space=vmem, size = 0x400, scoped, tag = 'output window, operand 0']
    %15 = vsyncpa [#allocation4], 0
    %16 = vsyncpa [#allocation5], 0
    %s17 = scalar_lea.sflag [#allocation5], 1
    %18 = vsyncpa %s17, 0
    loop: start=0, step=1, limit=4
    $region2: #{soft_q_forward.1} parent=1 // loop_pre_header
      _
    $region3: #{soft_q_forward.1} parent=1 // loop_header
      %s20 = sphi 0, %s24
      %p21 = scmp.ge.s32.totalorder %s20, 4
      %s30 = sphi 0, %s32
      %s33 = sphi 0, %s30
      %s34 = sphi 0, %s33
      %s50 = sphi 0, %s34
      %s54 = sphi 0, %s54
      %s56 = sphi 0, %s54
      %s57 = sphi 0, %s56
      %s71 = sphi 0, %s57
      %s75 = sphi 0, %s75
      %s77 = sphi 0, %s75
      %s78 = sphi 0, %s77
      %s92 = sphi 0, %s78
      %s96 = sphi 0, %s96
      %s98 = sphi 0, %s96
      %s99 = sphi 0, %s98
      %s113 = sphi 0, %s99
      %s117 = sphi 0, %s117
      %s119 = sphi 0, %s117
      %s120 = sphi 0, %s119
      %s134 = sphi 0, %s120
      %s138 = sphi 0, %s138
      %s140 = sphi 0, %s138
      %s141 = sphi 0, %s140
      %s155 = sphi 0, %s141
      %s159 = sphi 0, %s159
      %s161 = sphi 0, %s159
      %s162 = sphi 0, %s161
      %s176 = sphi 0, %s162
      %s180 = sphi 0, %s180
      %s182 = sphi 0, %s180
      %s183 = sphi 0, %s182
      %s197 = sphi 0, %s183
      %s201 = sphi 0, %s201
      %s203 = sphi 0, %s201
      %s204 = sphi 0, %s203
      %s218 = sphi 0, %s204
      %s224 = sphi 0, %s226
      %s227 = sphi 0, %s224
      %s228 = sphi 0, %s227
      %s244 = sphi 0, %s228
    $region4: #{soft_q_forward.1} parent=1 // loop_header_branch
      %23 = sbr.rel (%p21) target = $region8
    $region5: #{soft_q_forward.1} parent=1 // loop_body
      %s25 = ssub.s32 %s20, 1
      %s26 = ssub.s32 %s20, 2
      %s27 = sadd.s32 %s20, 1
      %s28 = ssub.s32 %s20, %s27
      %p29 = scmp.eq.s32.totalorder %s28, 0
      %s31 = sadd.s32 %s30, 1
      %s32 = scalar_select %p29, %s30, %s31
      %p35 = pneg %p29
      %p36 = scmp.eq.s32.totalorder %s20, 1
      %p37 = por %p35, %p36
      %p38 = scmp.ne.s32.totalorder %s30, %s33
      %p39 = scmp.eq.s32.totalorder %s20, 0
      %p40 = por %p38, %p39
      %p41 = scmp.ne.s32.totalorder %s30, %s33
      %p42 = scmp.eq.s32.totalorder %s25, 1
      %p43 = por %p41, %p42
      %p44 = scmp.ne.s32.totalorder %s33, %s34
      %p45 = scmp.eq.s32.totalorder %s25, 0
      %p46 = por %p44, %p45
      %p47 = scmp.ne.s32.totalorder %s33, %s34
      %p48 = scmp.eq.s32.totalorder %s26, 1
      %p49 = por %p47, %p48
      %p51 = scmp.ne.s32.totalorder %s34, %s50
      %p52 = scmp.eq.s32.totalorder %s26, 0
      %p53 = por %p51, %p52
      %s55 = sadd.s32 %s54, 1
      %p58 = scmp.eq.s32.totalorder %s20, 1
      %p59 = scmp.ne.s32.totalorder %s54, %s56
      %p60 = scmp.eq.s32.totalorder %s20, 0
      %p61 = por %p59, %p60
      %p62 = scmp.ne.s32.totalorder %s54, %s56
      %p63 = scmp.eq.s32.totalorder %s25, 1
      %p64 = por %p62, %p63
      %p65 = scmp.ne.s32.totalorder %s56, %s57
      %p66 = scmp.eq.s32.totalorder %s25, 0
      %p67 = por %p65, %p66
      %p68 = scmp.ne.s32.totalorder %s56, %s57
      %p69 = scmp.eq.s32.totalorder %s26, 1
      %p70 = por %p68, %p69
      %p72 = scmp.ne.s32.totalorder %s57, %s71
      %p73 = scmp.eq.s32.totalorder %s26, 0
      %p74 = por %p72, %p73
      %s76 = sadd.s32 %s75, 1
      %p79 = scmp.eq.s32.totalorder %s20, 1
      %p80 = scmp.ne.s32.totalorder %s75, %s77
      %p81 = scmp.eq.s32.totalorder %s20, 0
      %p82 = por %p80, %p81
      %p83 = scmp.ne.s32.totalorder %s75, %s77
      %p84 = scmp.eq.s32.totalorder %s25, 1
      %p85 = por %p83, %p84
      %p86 = scmp.ne.s32.totalorder %s77, %s78
      %p87 = scmp.eq.s32.totalorder %s25, 0
      %p88 = por %p86, %p87
      %p89 = scmp.ne.s32.totalorder %s77, %s78
      %p90 = scmp.eq.s32.totalorder %s26, 1
      %p91 = por %p89, %p90
      %p93 = scmp.ne.s32.totalorder %s78, %s92
      %p94 = scmp.eq.s32.totalorder %s26, 0
      %p95 = por %p93, %p94
      %s97 = sadd.s32 %s96, 1
      %p100 = scmp.eq.s32.totalorder %s20, 1
      %p101 = scmp.ne.s32.totalorder %s96, %s98
      %p102 = scmp.eq.s32.totalorder %s20, 0
      %p103 = por %p101, %p102
      %p104 = scmp.ne.s32.totalorder %s96, %s98
      %p105 = scmp.eq.s32.totalorder %s25, 1
      %p106 = por %p104, %p105
      %p107 = scmp.ne.s32.totalorder %s98, %s99
      %p108 = scmp.eq.s32.totalorder %s25, 0
      %p109 = por %p107, %p108
      %p110 = scmp.ne.s32.totalorder %s98, %s99
      %p111 = scmp.eq.s32.totalorder %s26, 1
      %p112 = por %p110, %p111
      %p114 = scmp.ne.s32.totalorder %s99, %s113
      %p115 = scmp.eq.s32.totalorder %s26, 0
      %p116 = por %p114, %p115
      %s118 = sadd.s32 %s117, 1
      %p121 = scmp.eq.s32.totalorder %s20, 1
      %p122 = scmp.ne.s32.totalorder %s117, %s119
      %p123 = scmp.eq.s32.totalorder %s20, 0
      %p124 = por %p122, %p123
      %p125 = scmp.ne.s32.totalorder %s117, %s119
      %p126 = scmp.eq.s32.totalorder %s25, 1
      %p127 = por %p125, %p126
      %p128 = scmp.ne.s32.totalorder %s119, %s120
      %p129 = scmp.eq.s32.totalorder %s25, 0
      %p130 = por %p128, %p129
      %p131 = scmp.ne.s32.totalorder %s119, %s120
      %p132 = scmp.eq.s32.totalorder %s26, 1
      %p133 = por %p131, %p132
      %p135 = scmp.ne.s32.totalorder %s120, %s134
      %p136 = scmp.eq.s32.totalorder %s26, 0
      %p137 = por %p135, %p136
      %s139 = sadd.s32 %s138, 1
      %p142 = scmp.eq.s32.totalorder %s20, 1
      %p143 = scmp.ne.s32.totalorder %s138, %s140
      %p144 = scmp.eq.s32.totalorder %s20, 0
      %p145 = por %p143, %p144
      %p146 = scmp.ne.s32.totalorder %s138, %s140
      %p147 = scmp.eq.s32.totalorder %s25, 1
      %p148 = por %p146, %p147
      %p149 = scmp.ne.s32.totalorder %s140, %s141
      %p150 = scmp.eq.s32.totalorder %s25, 0
      %p151 = por %p149, %p150
      %p152 = scmp.ne.s32.totalorder %s140, %s141
      %p153 = scmp.eq.s32.totalorder %s26, 1
      %p154 = por %p152, %p153
      %p156 = scmp.ne.s32.totalorder %s141, %s155
      %p157 = scmp.eq.s32.totalorder %s26, 0
      %p158 = por %p156, %p157
      %s160 = sadd.s32 %s159, 1
      %p163 = scmp.eq.s32.totalorder %s20, 1
      %p164 = scmp.ne.s32.totalorder %s159, %s161
      %p165 = scmp.eq.s32.totalorder %s20, 0
      %p166 = por %p164, %p165
      %p167 = scmp.ne.s32.totalorder %s159, %s161
      %p168 = scmp.eq.s32.totalorder %s25, 1
      %p169 = por %p167, %p168
      %p170 = scmp.ne.s32.totalorder %s161, %s162
      %p171 = scmp.eq.s32.totalorder %s25, 0
      %p172 = por %p170, %p171
      %p173 = scmp.ne.s32.totalorder %s161, %s162
      %p174 = scmp.eq.s32.totalorder %s26, 1
      %p175 = por %p173, %p174
      %p177 = scmp.ne.s32.totalorder %s162, %s176
      %p178 = scmp.eq.s32.totalorder %s26, 0
      %p179 = por %p177, %p178
      %s181 = sadd.s32 %s180, 1
      %p184 = scmp.eq.s32.totalorder %s20, 1
      %p185 = scmp.ne.s32.totalorder %s180, %s182
      %p186 = scmp.eq.s32.totalorder %s20, 0
      %p187 = por %p185, %p186
      %p188 = scmp.ne.s32.totalorder %s180, %s182
      %p189 = scmp.eq.s32.totalorder %s25, 1
      %p190 = por %p188, %p189
      %p191 = scmp.ne.s32.totalorder %s182, %s183
      %p192 = scmp.eq.s32.totalorder %s25, 0
      %p193 = por %p191, %p192
      %p194 = scmp.ne.s32.totalorder %s182, %s183
      %p195 = scmp.eq.s32.totalorder %s26, 1
      %p196 = por %p194, %p195
      %p198 = scmp.ne.s32.totalorder %s183, %s197
      %p199 = scmp.eq.s32.totalorder %s26, 0
      %p200 = por %p198, %p199
      %s202 = sadd.s32 %s201, 1
      %p205 = scmp.eq.s32.totalorder %s20, 1
      %p206 = scmp.ne.s32.totalorder %s201, %s203
      %p207 = scmp.eq.s32.totalorder %s20, 0
      %p208 = por %p206, %p207
      %p209 = scmp.ne.s32.totalorder %s201, %s203
      %p210 = scmp.eq.s32.totalorder %s25, 1
      %p211 = por %p209, %p210
      %p212 = scmp.ne.s32.totalorder %s203, %s204
      %p213 = scmp.eq.s32.totalorder %s25, 0
      %p214 = por %p212, %p213
      %p215 = scmp.ne.s32.totalorder %s203, %s204
      %p216 = scmp.eq.s32.totalorder %s26, 1
      %p217 = por %p215, %p216
      %p219 = scmp.ne.s32.totalorder %s204, %s218
      %p220 = scmp.eq.s32.totalorder %s26, 0
      %p221 = por %p219, %p220
      %s222 = ssub.s32 %s20, %s27
      %p223 = scmp.eq.s32.totalorder %s222, 0
      %s225 = sadd.s32 %s224, 1
      %s226 = scalar_select %p223, %s224, %s225
      %p229 = pneg %p223
      %p230 = scmp.eq.s32.totalorder %s20, 1
      %p231 = por %p229, %p230
      %p232 = scmp.ne.s32.totalorder %s224, %s227
      %p233 = scmp.eq.s32.totalorder %s20, 0
      %p234 = por %p232, %p233
      %p235 = scmp.ne.s32.totalorder %s224, %s227
      %p236 = scmp.eq.s32.totalorder %s25, 1
      %p237 = por %p235, %p236
      %p238 = scmp.ne.s32.totalorder %s227, %s228
      %p239 = scmp.eq.s32.totalorder %s25, 0
      %p240 = por %p238, %p239
      %p241 = scmp.ne.s32.totalorder %s227, %s228
      %p242 = scmp.eq.s32.totalorder %s26, 1
      %p243 = por %p241, %p242
      %p245 = scmp.ne.s32.totalorder %s228, %s244
      %p246 = scmp.eq.s32.totalorder %s26, 0
      %p247 = por %p245, %p246
      %p248 = scmp.le.s32.totalorder 1, %s20
      %p249 = scmp.lt.s32.totalorder %s20, 3
      %p250 = pnand %p248, %p249
      %p251 = pneg %p250
      // Predicated region
      $region9: #{soft_q_forward.1} parent=5 // pred_check
        _
      $region10: #{soft_q_forward.1} parent=5 // pred_check_branch
        %253 = sbr.rel (%p250) target = $region12
      $region11: #{soft_q_forward.1} parent=5 // pred_region
        %s254 = ssub.s32 %s20, 1
        // Predicated region
        $region13: #{soft_q_forward.1} parent=11 // pred_check
          %p255 = pneg %p67
        $region14: #{soft_q_forward.1} parent=11 // pred_check_branch
          %257 = sbr.rel (%p255) target = $region16
        $region15: #{soft_q_forward.1} parent=11 // pred_region
          _
        $region16: #{soft_q_forward.1} parent=11 // pred_fallthru
          _
        // Predicated region
        $region17: #{soft_q_forward.1} parent=11 // pred_check
          %p258 = pneg %p88
        $region18: #{soft_q_forward.1} parent=11 // pred_check_branch
          %260 = sbr.rel (%p258) target = $region20
        $region19: #{soft_q_forward.1} parent=11 // pred_region
          _
        $region20: #{soft_q_forward.1} parent=11 // pred_fallthru
          _
        // Predicated region
        $region21: #{soft_q_forward.1} parent=11 // pred_check
          %p261 = pneg %p109
        $region22: #{soft_q_forward.1} parent=11 // pred_check_branch
          %263 = sbr.rel (%p261) target = $region24
        $region23: #{soft_q_forward.1} parent=11 // pred_region
          _
        $region24: #{soft_q_forward.1} parent=11 // pred_fallthru
          _
        // Predicated region
        $region25: #{soft_q_forward.1} parent=11 // pred_check
          %p264 = pneg %p130
        $region26: #{soft_q_forward.1} parent=11 // pred_check_branch
          %266 = sbr.rel (%p264) target = $region28
        $region27: #{soft_q_forward.1} parent=11 // pred_region
          _
        $region28: #{soft_q_forward.1} parent=11 // pred_fallthru
          _
        // Predicated region
        $region29: #{soft_q_forward.1} parent=11 // pred_check
          %p267 = pneg %p151
        $region30: #{soft_q_forward.1} parent=11 // pred_check_branch
          %269 = sbr.rel (%p267) target = $region32
        $region31: #{soft_q_forward.1} parent=11 // pred_region
          %s271 = ssub.s32 4096, 4096
          %272 = vsyncadd [#allocation4], %s271
          %s273 = sshll.u32 [#allocation3], 4
          %s274 = int_to_ptr.vmem [resolvable:$true] %s273
          %279 = dma.hbm_to_vmem [thread:$0]  %s5, 4096, %s274, [#allocation4], 128, 128, 8
        $region32: #{soft_q_forward.1} parent=11 // pred_fallthru
          _
        // Predicated region
        $region33: #{soft_q_forward.1} parent=11 // pred_check
          %p280 = pneg %p172
        $region34: #{soft_q_forward.1} parent=11 // pred_check_branch
          %282 = sbr.rel (%p280) target = $region36
        $region35: #{soft_q_forward.1} parent=11 // pred_region
          _
        $region36: #{soft_q_forward.1} parent=11 // pred_fallthru
          _
        // Predicated region
        $region37: #{soft_q_forward.1} parent=11 // pred_check
          %p283 = pneg %p193
        $region38: #{soft_q_forward.1} parent=11 // pred_check_branch
          %285 = sbr.rel (%p283) target = $region40
        $region39: #{soft_q_forward.1} parent=11 // pred_region
          _
        $region40: #{soft_q_forward.1} parent=11 // pred_fallthru
          _
        // Predicated region
        $region41: #{soft_q_forward.1} parent=11 // pred_check
          %p286 = pneg %p214
        $region42: #{soft_q_forward.1} parent=11 // pred_check_branch
          %288 = sbr.rel (%p286) target = $region44
        $region43: #{soft_q_forward.1} parent=11 // pred_region
          _
        $region44: #{soft_q_forward.1} parent=11 // pred_fallthru
          _
      $region12: #{soft_q_forward.1} parent=5 // pred_fallthru
        _
      %p289 = scmp.lt.s32.totalorder %s20, 2
      // Predicated region
      $region45: #{soft_q_forward.1} parent=5 // pred_check
        %p290 = pneg %p289
      $region46: #{soft_q_forward.1} parent=5 // pred_check_branch
        %292 = sbr.rel (%p290) target = $region48
      $region47: #{soft_q_forward.1} parent=5 // pred_region
        // Predicated region
        $region49: #{soft_q_forward.1} parent=47 // pred_check
          %p293 = pneg %p40
        $region50: #{soft_q_forward.1} parent=47 // pred_check_branch
          %295 = sbr.rel (%p293) target = $region52
        $region51: #{soft_q_forward.1} parent=47 // pred_region
          %s296 = smul.u32 16, %s20
          %p297 = scmp.lt.s32.totalorder %s296, 31
          %s298 = scalar_select %p297, %s296, 31
          %s299 = smul.addr %s298, 8
          %s300 = scalar_lea.vmem %s0, %s299
          %s301 = smul.u32 16, %s20
        $region52: #{soft_q_forward.1} parent=47 // pred_fallthru
          _
      $region48: #{soft_q_forward.1} parent=5 // pred_fallthru
        _
      %p302 = scmp.le.s32.totalorder 1, %s20
      %p303 = scmp.lt.s32.totalorder %s20, 3
      %p304 = pnand %p302, %p303
      %p305 = pneg %p304
      // Predicated region
      $region53: #{soft_q_forward.1} parent=5 // pred_check
        _
      $region54: #{soft_q_forward.1} parent=5 // pred_check_branch
        %307 = sbr.rel (%p304) target = $region56
      $region55: #{soft_q_forward.1} parent=5 // pred_region
        %s308 = ssub.s32 %s20, 1
        // Predicated region
        $region57: #{soft_q_forward.1} parent=55 // pred_check
          %p309 = pneg %p151
        $region58: #{soft_q_forward.1} parent=55 // pred_check_branch
          %311 = sbr.rel (%p309) target = $region60
        $region59: #{soft_q_forward.1} parent=55 // pred_region
          %312 = dma.done [#allocation4], 4096
        $region60: #{soft_q_forward.1} parent=55 // pred_fallthru
          _
        %s313 = smul.u32 16, %s25
        %p314 = scmp.lt.s32.totalorder %s313, 31
        %s315 = scalar_select %p314, %s313, 31
        %s316 = smul.addr %s315, 8
        %s317 = scalar_lea.vmem %s0, %s316
        %p318 = pneg %p46
        %p319 = pneg %p43
        %p320 = pneg %p67
        %p321 = pneg %p64
        %p322 = pneg %p88
        %p323 = pneg %p85
        %p324 = pneg %p109
        %p325 = pneg %p106
        %p326 = pneg %p130
        %p327 = pneg %p127
        %p328 = pneg %p151
        %p329 = pneg %p148
        %p330 = pneg %p172
        %p331 = pneg %p169
        %p332 = pneg %p193
        %p333 = pneg %p190
        %p334 = pneg %p214
        %p335 = pneg %p211
        %p336 = pneg %p240
        %p337 = pneg %p237
        %s338 = sand.u32 %s227, 1
        %s339 = scalar_lea.sflag [#allocation5], %s338
        %s340 = sand.u32 %s227, 1
        %s341 = scalar_lea.vmem [#allocation6], %s340
        %s342 = smul.u32 16, %s25
        %p343 = scmp.lt.s32.totalorder %s342, 31
        %s344 = scalar_select %p343, %s342, 31
        %s345 = smul.addr %s344, 8
        %s346 = scalar_lea.vmem %s0, %s345
        %s347 = smul.u32 16, %s25
        %v349 = vld [vmem:[%s346] sm:$0xff]
        %v350 = vld [vmem:[%s346 + $0x8] sm:$0xff]
        %v351 = vld [vmem:[%s346 + $0x10] sm:$0xff]
        %v352 = vld [vmem:[%s346 + $0x18] sm:$0xff]
        %v353 = vld [vmem:[%s346 + $0x20] sm:$0xff]
        %v354 = vld [vmem:[%s346 + $0x28] sm:$0xff]
        %v355 = vld [vmem:[%s346 + $0x30] sm:$0xff]
        %v356 = vld [vmem:[%s346 + $0x38] sm:$0xff]
        %v357 = vld [vmem:[%s346 + $0x40] sm:$0xff]
        %v358 = vld [vmem:[%s346 + $0x48] sm:$0xff]
        %v359 = vld [vmem:[%s346 + $0x50] sm:$0xff]
        %v360 = vld [vmem:[%s346 + $0x58] sm:$0xff]
        %v361 = vld [vmem:[%s346 + $0x60] sm:$0xff]
        %v362 = vld [vmem:[%s346 + $0x68] sm:$0xff]
        %v363 = vld [vmem:[%s346 + $0x70] sm:$0xff]
        %v364 = vld [vmem:[%s346 + $0x78] sm:$0xff]
        %v365 = vpack.c.bf16 %v350, %v349
        %v366 = vpack.c.bf16 %v352, %v351
        %v367 = vpack.c.bf16 %v354, %v353
        %v368 = vpack.c.bf16 %v356, %v355
        %v369 = vpack.c.bf16 %v358, %v357
        %v370 = vpack.c.bf16 %v360, %v359
        %v371 = vpack.c.bf16 %v362, %v361
        %v372 = vpack.c.bf16 %v364, %v363
        %v373 = vld [vmem:[%s1] sm:$0xff]
        %v374 = vld [vmem:[%s1 + $0x8] sm:$0xff]
        %v375 = vld [vmem:[%s1 + $0x10] sm:$0xff]
        %v376 = vld [vmem:[%s1 + $0x18] sm:$0xff]
        %v377 = vld [vmem:[%s1 + $0x20] sm:$0xff]
        %v378 = vld [vmem:[%s2] sm:$0x3]
        %v380 = vlaneseq
        %v381 = vshrl.u32 %v380, 7
        %v382 = vsub.s32 0, %v381
        %v383 = vrot.slane %v378, %v382
        %v384 = vlaneseq
        %v385 = vshrl.u32 %v384, 7
        %v386 = vsub.s32 1, %v385
        %v387 = vrot.slane %v378, %v386
        %v395 = vunpack.c.l.b16 %v373
        %v396 = vunpack.c.h.b16 %v373
        %v397 = vunpack.c.l.b16 %v374
        %v398 = vunpack.c.h.b16 %v374
        %v399 = vunpack.c.l.b16 %v375
        %v400 = vunpack.c.h.b16 %v375
        %v401 = vunpack.c.l.b16 %v376
        %v402 = vunpack.c.h.b16 %v376
        %v403 = vunpack.c.l.b16 %v377
        %v404 = vunpack.c.h.b16 %v377
        %v405 = vpack.c.b16 %v397, %v395
        %v406 = vpack.c.b16 %v398, %v396
        %v407 = vpack.c.b16 %v401, %v399
        %v408 = vpack.c.b16 %v402, %v400
        %v409 = vpack.c.b16 %v403, %v403
        %v410 = vpack.c.b16 %v404, %v404
        %vm415 = vcmask 326656
        %v417 = vsel %vm415, %v365, 0
        %v420 = vsel %vm415, %v366, 0
        %v423 = vsel %vm415, %v367, 0
        %v426 = vsel %vm415, %v368, 0
        %v429 = vsel %vm415, %v369, 0
        %v432 = vsel %vm415, %v370, 0
        %v435 = vsel %vm415, %v371, 0
        %v438 = vsel %vm415, %v372, 0
        %vm440 = vcmask 1043456
        %v442 = vsel %vm440, %v409, 0
        %v445 = vsel %vm440, %v410, 0
        %447 = vmatprep.subr.bf16.mxu0 %v406
        %448 = vmatpush1.bf16.msra.mxu0 %v405
        %449 = vmatprep.subr.bf16.mxu0 %v408
        %450 = vmatpush1.bf16.msra.mxu0 %v407
        %451 = vmatprep.subr.bf16.mxu0 %v445
        %452 = vmatpush1.bf16.msra.mxu0 %v442
        %453 = vmatprep.subr.bf16.mxu0 0
        %454 = vmatpush1.bf16.msra.mxu0 0
        %455 = vmatprep.subr.bf16.mxu0 0
        %456 = vmatpush1.bf16.msra.mxu0 0
        %457 = vmatprep.subr.bf16.mxu0 0
        %458 = vmatpush1.bf16.msra.mxu0 0
        %459 = vmatprep.subr.bf16.mxu0 0
        %460 = vmatpush1.bf16.msra.mxu0 0
        %461 = vmatprep.subr.bf16.mxu0 0
        %462 = vmatpush1.bf16.msra.mxu0 0
        %463 = vmatprep.subr.bf16.mxu0 0
        %464 = vmatpush1.bf16.msra.mxu0 0
        %465 = vmatprep.subr.bf16.mxu0 0
        %466 = vmatpush1.bf16.msra.mxu0 0
        %467 = vmatprep.subr.bf16.mxu0 0
        %468 = vmatpush1.bf16.msra.mxu0 0
        %469 = vmatprep.subr.bf16.mxu0 0
        %470 = vmatpush1.bf16.msra.mxu0 0
        %471 = vmatprep.subr.bf16.mxu0 0
        %472 = vmatpush1.bf16.msra.mxu0 0
        %473 = vmatprep.subr.bf16.mxu0 0
        %474 = vmatpush1.bf16.msra.mxu0 0
        %475 = vmatprep.subr.bf16.mxu0 0
        %476 = vmatpush1.bf16.msra.mxu0 0
        %477 = vmatprep.subr.bf16.mxu0 0
        %478 = vmatpush1.bf16.msra.mxu0 0
        %479 = vmatprep.mubr.bf16.mxu0 0
        %480 = vmatmul.mubr.bf16.gmra.mrb[0].mxu0 %v417
        %v481 = vpop.f32.mrb[0].mxu0
        %v482 = vadd.f32 %v383, %v481
        %v483 = vpop.f32.mrb[0].mxu0
        %v484 = vadd.f32 %v387, %v483
        %v485 = vpop.f32.mrb[0].mxu0
        %v486 = vadd.f32 %v383, %v485
        %v487 = vpop.f32.mrb[0].mxu0
        %v488 = vadd.f32 %v387, %v487
        %489 = vmatprep.mubr.bf16.mxu0 0
        %490 = vmatmul.mubr.bf16.gmra.mrb[0].mxu0 %v420
        %v491 = vpop.f32.mrb[0].mxu0
        %v492 = vadd.f32 %v383, %v491
        %v493 = vpop.f32.mrb[0].mxu0
        %v494 = vadd.f32 %v387, %v493
        %v495 = vpop.f32.mrb[0].mxu0
        %v496 = vadd.f32 %v383, %v495
        %v497 = vpop.f32.mrb[0].mxu0
        %v498 = vadd.f32 %v387, %v497
        %499 = vmatprep.mubr.bf16.mxu0 0
        %500 = vmatmul.mubr.bf16.gmra.mrb[0].mxu0 %v423
        %v501 = vpop.f32.mrb[0].mxu0
        %v502 = vadd.f32 %v383, %v501
        %v503 = vpop.f32.mrb[0].mxu0
        %v504 = vadd.f32 %v387, %v503
        %v505 = vpop.f32.mrb[0].mxu0
        %v506 = vadd.f32 %v383, %v505
        %v507 = vpop.f32.mrb[0].mxu0
        %v508 = vadd.f32 %v387, %v507
        %509 = vmatprep.mubr.bf16.mxu0 0
        %510 = vmatmul.mubr.bf16.gmra.mrb[0].mxu0 %v426
        %v511 = vpop.f32.mrb[0].mxu0
        %v512 = vadd.f32 %v383, %v511
        %v513 = vpop.f32.mrb[0].mxu0
        %v514 = vadd.f32 %v387, %v513
        %v515 = vpop.f32.mrb[0].mxu0
        %v516 = vadd.f32 %v383, %v515
        %v517 = vpop.f32.mrb[0].mxu0
        %v518 = vadd.f32 %v387, %v517
        %519 = vmatprep.mubr.bf16.mxu0 0
        %520 = vmatmul.mubr.bf16.gmra.mrb[0].mxu0 %v429
        %v521 = vpop.f32.mrb[0].mxu0
        %v522 = vadd.f32 %v383, %v521
        %v523 = vpop.f32.mrb[0].mxu0
        %v524 = vadd.f32 %v387, %v523
        %v525 = vpop.f32.mrb[0].mxu0
        %v526 = vadd.f32 %v383, %v525
        %v527 = vpop.f32.mrb[0].mxu0
        %v528 = vadd.f32 %v387, %v527
        %529 = vmatprep.mubr.bf16.mxu0 0
        %530 = vmatmul.mubr.bf16.gmra.mrb[0].mxu0 %v432
        %v531 = vpop.f32.mrb[0].mxu0
        %v532 = vadd.f32 %v383, %v531
        %v533 = vpop.f32.mrb[0].mxu0
        %v534 = vadd.f32 %v387, %v533
        %v535 = vpop.f32.mrb[0].mxu0
        %v536 = vadd.f32 %v383, %v535
        %v537 = vpop.f32.mrb[0].mxu0
        %v538 = vadd.f32 %v387, %v537
        %539 = vmatprep.mubr.bf16.mxu0 0
        %540 = vmatmul.mubr.bf16.gmra.mrb[0].mxu0 %v435
        %v541 = vpop.f32.mrb[0].mxu0
        %v542 = vadd.f32 %v383, %v541
        %v543 = vpop.f32.mrb[0].mxu0
        %v544 = vadd.f32 %v387, %v543
        %v545 = vpop.f32.mrb[0].mxu0
        %v546 = vadd.f32 %v383, %v545
        %v547 = vpop.f32.mrb[0].mxu0
        %v548 = vadd.f32 %v387, %v547
        %549 = vmatprep.mubr.bf16.mxu0 0
        %550 = vmatmul.mubr.bf16.gmra.mrb[0].mxu0 %v438
        %v551 = vpop.f32.mrb[0].mxu0
        %v552 = vadd.f32 %v383, %v551
        %v553 = vpop.f32.mrb[0].mxu0
        %v554 = vadd.f32 %v387, %v553
        %v555 = vpop.f32.mrb[0].mxu0
        %v556 = vadd.f32 %v383, %v555
        %v557 = vpop.f32.mrb[0].mxu0
        %v558 = vadd.f32 %v387, %v557
        %559 = vdwg.mxu0
        %v560 = vmax.f32 %v482, 0.0
        %v561 = vmax.f32 %v484, 0.0
        %v562 = vmax.f32 %v486, 0.0
        %v563 = vmax.f32 %v488, 0.0
        %v564 = vmax.f32 %v492, 0.0
        %v565 = vmax.f32 %v494, 0.0
        %v566 = vmax.f32 %v496, 0.0
        %v567 = vmax.f32 %v498, 0.0
        %v568 = vmax.f32 %v502, 0.0
        %v569 = vmax.f32 %v504, 0.0
        %v570 = vmax.f32 %v506, 0.0
        %v571 = vmax.f32 %v508, 0.0
        %v572 = vmax.f32 %v512, 0.0
        %v573 = vmax.f32 %v514, 0.0
        %v574 = vmax.f32 %v516, 0.0
        %v575 = vmax.f32 %v518, 0.0
        %v576 = vmax.f32 %v522, 0.0
        %v577 = vmax.f32 %v524, 0.0
        %v578 = vmax.f32 %v526, 0.0
        %v579 = vmax.f32 %v528, 0.0
        %v580 = vmax.f32 %v532, 0.0
        %v581 = vmax.f32 %v534, 0.0
        %v582 = vmax.f32 %v536, 0.0
        %v583 = vmax.f32 %v538, 0.0
        %v584 = vmax.f32 %v542, 0.0
        %v585 = vmax.f32 %v544, 0.0
        %v586 = vmax.f32 %v546, 0.0
        %v587 = vmax.f32 %v548, 0.0
        %v588 = vmax.f32 %v552, 0.0
        %v589 = vmax.f32 %v554, 0.0
        %v590 = vmax.f32 %v556, 0.0
        %v591 = vmax.f32 %v558, 0.0
        %v592 = vpack.c.bf16 %v562, %v560
        %v593 = vpack.c.bf16 %v563, %v561
        %v594 = vpack.c.bf16 %v566, %v564
        %v595 = vpack.c.bf16 %v567, %v565
        %v596 = vpack.c.bf16 %v570, %v568
        %v597 = vpack.c.bf16 %v571, %v569
        %v598 = vpack.c.bf16 %v574, %v572
        %v599 = vpack.c.bf16 %v575, %v573
        %v600 = vpack.c.bf16 %v578, %v576
        %v601 = vpack.c.bf16 %v579, %v577
        %v602 = vpack.c.bf16 %v582, %v580
        %v603 = vpack.c.bf16 %v583, %v581
        %v604 = vpack.c.bf16 %v586, %v584
        %v605 = vpack.c.bf16 %v587, %v585
        %v606 = vpack.c.bf16 %v590, %v588
        %v607 = vpack.c.bf16 %v591, %v589
        %v608 = vld [vmem:[%s3] sm:$0xff]
        %v609 = vld [vmem:[%s3 + $0x8] sm:$0xff]
        %v610 = vld [vmem:[%s3 + $0x10] sm:$0xff]
        %v611 = vld [vmem:[%s3 + $0x18] sm:$0xff]
        %v612 = vld [vmem:[%s3 + $0x20] sm:$0xff]
        %v613 = vld [vmem:[%s3 + $0x28] sm:$0xff]
        %v614 = vld [vmem:[%s3 + $0x30] sm:$0xff]
        %v615 = vld [vmem:[%s3 + $0x38] sm:$0xff]
        %v616 = vld [vmem:[%s3 + $0x40] sm:$0xff]
        %v617 = vld [vmem:[%s3 + $0x48] sm:$0xff]
        %v618 = vld [vmem:[%s3 + $0x50] sm:$0xff]
        %v619 = vld [vmem:[%s3 + $0x58] sm:$0xff]
        %v620 = vld [vmem:[%s3 + $0x60] sm:$0xff]
        %v621 = vld [vmem:[%s3 + $0x68] sm:$0xff]
        %v622 = vld [vmem:[%s3 + $0x70] sm:$0xff]
        %v623 = vld [vmem:[%s3 + $0x78] sm:$0xff]
        %v624 = vld [vmem:[%s3 + $0x80] sm:$0xff]
        %v625 = vld [vmem:[%s3 + $0x88] sm:$0xff]
        %v626 = vld [vmem:[%s3 + $0x90] sm:$0xff]
        %v627 = vld [vmem:[%s3 + $0x98] sm:$0xff]
        %v628 = vld [vmem:[%s3 + $0xa0] sm:$0xff]
        %v629 = vld [vmem:[%s3 + $0xa8] sm:$0xff]
        %v630 = vld [vmem:[%s3 + $0xb0] sm:$0xff]
        %v631 = vld [vmem:[%s3 + $0xb8] sm:$0xff]
        %v632 = vld [vmem:[%s3 + $0xc0] sm:$0xff]
        %v633 = vld [vmem:[%s3 + $0xc8] sm:$0xff]
        %v634 = vld [vmem:[%s3 + $0xd0] sm:$0xff]
        %v635 = vld [vmem:[%s3 + $0xd8] sm:$0xff]
        %v636 = vld [vmem:[%s3 + $0xe0] sm:$0xff]
        %v637 = vld [vmem:[%s3 + $0xe8] sm:$0xff]
        %v638 = vld [vmem:[%s3 + $0xf0] sm:$0xff]
        %v639 = vld [vmem:[%s3 + $0xf8] sm:$0xff]
        %v640 = vld [vmem:[%s4] sm:$0x3]
        %v642 = vlaneseq
        %v643 = vshrl.u32 %v642, 7
        %v644 = vsub.s32 0, %v643
        %v645 = vrot.slane %v640, %v644
        %v646 = vlaneseq
        %v647 = vshrl.u32 %v646, 7
        %v648 = vsub.s32 1, %v647
        %v649 = vrot.slane %v640, %v648
        %v684 = vunpack.c.l.b16 %v608
        %v685 = vunpack.c.h.b16 %v608
        %v686 = vunpack.c.l.b16 %v609
        %v687 = vunpack.c.h.b16 %v609
        %v688 = vunpack.c.l.b16 %v610
        %v689 = vunpack.c.h.b16 %v610
        %v690 = vunpack.c.l.b16 %v611
        %v691 = vunpack.c.h.b16 %v611
        %v692 = vunpack.c.l.b16 %v612
        %v693 = vunpack.c.h.b16 %v612
        %v694 = vunpack.c.l.b16 %v613
        %v695 = vunpack.c.h.b16 %v613
        %v696 = vunpack.c.l.b16 %v614
        %v697 = vunpack.c.h.b16 %v614
        %v698 = vunpack.c.l.b16 %v615
        %v699 = vunpack.c.h.b16 %v615
        %v700 = vunpack.c.l.b16 %v616
        %v701 = vunpack.c.h.b16 %v616
        %v702 = vunpack.c.l.b16 %v617
        %v703 = vunpack.c.h.b16 %v617
        %v704 = vunpack.c.l.b16 %v618
        %v705 = vunpack.c.h.b16 %v618
        %v706 = vunpack.c.l.b16 %v619
        %v707 = vunpack.c.h.b16 %v619
        %v708 = vunpack.c.l.b16 %v620
        %v709 = vunpack.c.h.b16 %v620
        %v710 = vunpack.c.l.b16 %v621
        %v711 = vunpack.c.h.b16 %v621
        %v712 = vunpack.c.l.b16 %v622
        %v713 = vunpack.c.h.b16 %v622
        %v714 = vunpack.c.l.b16 %v623
        %v715 = vunpack.c.h.b16 %v623
        %v716 = vunpack.c.l.b16 %v624
        %v717 = vunpack.c.h.b16 %v624
        %v718 = vunpack.c.l.b16 %v625
        %v719 = vunpack.c.h.b16 %v625
        %v720 = vunpack.c.l.b16 %v626
        %v721 = vunpack.c.h.b16 %v626
        %v722 = vunpack.c.l.b16 %v627
        %v723 = vunpack.c.h.b16 %v627
        %v724 = vunpack.c.l.b16 %v628
        %v725 = vunpack.c.h.b16 %v628
        %v726 = vunpack.c.l.b16 %v629
        %v727 = vunpack.c.h.b16 %v629
        %v728 = vunpack.c.l.b16 %v630
        %v729 = vunpack.c.h.b16 %v630
        %v730 = vunpack.c.l.b16 %v631
        %v731 = vunpack.c.h.b16 %v631
        %v732 = vunpack.c.l.b16 %v632
        %v733 = vunpack.c.h.b16 %v632
        %v734 = vunpack.c.l.b16 %v633
        %v735 = vunpack.c.h.b16 %v633
        %v736 = vunpack.c.l.b16 %v634
        %v737 = vunpack.c.h.b16 %v634
        %v738 = vunpack.c.l.b16 %v635
        %v739 = vunpack.c.h.b16 %v635
        %v740 = vunpack.c.l.b16 %v636
        %v741 = vunpack.c.h.b16 %v636
        %v742 = vunpack.c.l.b16 %v637
        %v743 = vunpack.c.h.b16 %v637
        %v744 = vunpack.c.l.b16 %v638
        %v745 = vunpack.c.h.b16 %v638
        %v746 = vunpack.c.l.b16 %v639
        %v747 = vunpack.c.h.b16 %v639
        %v748 = vpack.c.b16 %v686, %v684
        %v749 = vpack.c.b16 %v687, %v685
        %v750 = vpack.c.b16 %v690, %v688
        %v751 = vpack.c.b16 %v691, %v689
        %v752 = vpack.c.b16 %v694, %v692
        %v753 = vpack.c.b16 %v695, %v693
        %v754 = vpack.c.b16 %v698, %v696
        %v755 = vpack.c.b16 %v699, %v697
        %v756 = vpack.c.b16 %v702, %v700
        %v757 = vpack.c.b16 %v703, %v701
        %v758 = vpack.c.b16 %v706, %v704
        %v759 = vpack.c.b16 %v707, %v705
        %v760 = vpack.c.b16 %v710, %v708
        %v761 = vpack.c.b16 %v711, %v709
        %v762 = vpack.c.b16 %v714, %v712
        %v763 = vpack.c.b16 %v715, %v713
        %v764 = vpack.c.b16 %v718, %v716
        %v765 = vpack.c.b16 %v719, %v717
        %v766 = vpack.c.b16 %v722, %v720
        %v767 = vpack.c.b16 %v723, %v721
        %v768 = vpack.c.b16 %v726, %v724
        %v769 = vpack.c.b16 %v727, %v725
        %v770 = vpack.c.b16 %v730, %v728
        %v771 = vpack.c.b16 %v731, %v729
        %v772 = vpack.c.b16 %v734, %v732
        %v773 = vpack.c.b16 %v735, %v733
        %v774 = vpack.c.b16 %v738, %v736
        %v775 = vpack.c.b16 %v739, %v737
        %v776 = vpack.c.b16 %v742, %v740
        %v777 = vpack.c.b16 %v743, %v741
        %v778 = vpack.c.b16 %v746, %v744
        %v779 = vpack.c.b16 %v747, %v745
        %812 = vmatprep.subr.bf16.mxu0 %v749
        %813 = vmatpush1.bf16.msra.mxu0 %v748
        %814 = vmatprep.subr.bf16.mxu0 %v751
        %815 = vmatpush1.bf16.msra.mxu0 %v750
        %816 = vmatprep.subr.bf16.mxu0 %v753
        %817 = vmatpush1.bf16.msra.mxu0 %v752
        %818 = vmatprep.subr.bf16.mxu0 %v755
        %819 = vmatpush1.bf16.msra.mxu0 %v754
        %820 = vmatprep.subr.bf16.mxu0 %v757
        %821 = vmatpush1.bf16.msra.mxu0 %v756
        %822 = vmatprep.subr.bf16.mxu0 %v759
        %823 = vmatpush1.bf16.msra.mxu0 %v758
        %824 = vmatprep.subr.bf16.mxu0 %v761
        %825 = vmatpush1.bf16.msra.mxu0 %v760
        %826 = vmatprep.subr.bf16.mxu0 %v763
        %827 = vmatpush1.bf16.msra.mxu0 %v762
        %828 = vmatprep.subr.bf16.mxu0 %v765
        %829 = vmatpush1.bf16.msra.mxu0 %v764
        %830 = vmatprep.subr.bf16.mxu0 %v767
        %831 = vmatpush1.bf16.msra.mxu0 %v766
        %832 = vmatprep.subr.bf16.mxu0 %v769
        %833 = vmatpush1.bf16.msra.mxu0 %v768
        %834 = vmatprep.subr.bf16.mxu0 %v771
        %835 = vmatpush1.bf16.msra.mxu0 %v770
        %836 = vmatprep.subr.bf16.mxu0 %v773
        %837 = vmatpush1.bf16.msra.mxu0 %v772
        %838 = vmatprep.subr.bf16.mxu0 %v775
        %839 = vmatpush1.bf16.msra.mxu0 %v774
        %840 = vmatprep.subr.bf16.mxu0 %v777
        %841 = vmatpush1.bf16.msra.mxu0 %v776
        %842 = vmatprep.subr.bf16.mxu0 %v779
        %843 = vmatpush1.bf16.msra.mxu0 %v778
        %844 = vmatprep.mubr.bf16.mxu0 %v593
        %845 = vmatmul.mubr.bf16.gmra.mrb[0].mxu0 %v592
        %v846 = vpop.f32.mrb[0].mxu0
        %v847 = vadd.f32 %v645, %v846
        %v848 = vpop.f32.mrb[0].mxu0
        %v849 = vadd.f32 %v649, %v848
        %v850 = vpop.f32.mrb[0].mxu0
        %v851 = vadd.f32 %v645, %v850
        %v852 = vpop.f32.mrb[0].mxu0
        %v853 = vadd.f32 %v649, %v852
        %854 = vmatprep.mubr.bf16.mxu0 %v595
        %855 = vmatmul.mubr.bf16.gmra.mrb[0].mxu0 %v594
        %v856 = vpop.f32.mrb[0].mxu0
        %v857 = vadd.f32 %v645, %v856
        %v858 = vpop.f32.mrb[0].mxu0
        %v859 = vadd.f32 %v649, %v858
        %v860 = vpop.f32.mrb[0].mxu0
        %v861 = vadd.f32 %v645, %v860
        %v862 = vpop.f32.mrb[0].mxu0
        %v863 = vadd.f32 %v649, %v862
        %864 = vmatprep.mubr.bf16.mxu0 %v597
        %865 = vmatmul.mubr.bf16.gmra.mrb[0].mxu0 %v596
        %v866 = vpop.f32.mrb[0].mxu0
        %v867 = vadd.f32 %v645, %v866
        %v868 = vpop.f32.mrb[0].mxu0
        %v869 = vadd.f32 %v649, %v868
        %v870 = vpop.f32.mrb[0].mxu0
        %v871 = vadd.f32 %v645, %v870
        %v872 = vpop.f32.mrb[0].mxu0
        %v873 = vadd.f32 %v649, %v872
        %874 = vmatprep.mubr.bf16.mxu0 %v599
        %875 = vmatmul.mubr.bf16.gmra.mrb[0].mxu0 %v598
        %v876 = vpop.f32.mrb[0].mxu0
        %v877 = vadd.f32 %v645, %v876
        %v878 = vpop.f32.mrb[0].mxu0
        %v879 = vadd.f32 %v649, %v878
        %v880 = vpop.f32.mrb[0].mxu0
        %v881 = vadd.f32 %v645, %v880
        %v882 = vpop.f32.mrb[0].mxu0
        %v883 = vadd.f32 %v649, %v882
        %884 = vmatprep.mubr.bf16.mxu0 %v601
        %885 = vmatmul.mubr.bf16.gmra.mrb[0].mxu0 %v600
        %v886 = vpop.f32.mrb[0].mxu0
        %v887 = vadd.f32 %v645, %v886
        %v888 = vpop.f32.mrb[0].mxu0
        %v889 = vadd.f32 %v649, %v888
        %v890 = vpop.f32.mrb[0].mxu0
        %v891 = vadd.f32 %v645, %v890
        %v892 = vpop.f32.mrb[0].mxu0
        %v893 = vadd.f32 %v649, %v892
        %894 = vmatprep.mubr.bf16.mxu0 %v603
        %895 = vmatmul.mubr.bf16.gmra.mrb[0].mxu0 %v602
        %v896 = vpop.f32.mrb[0].mxu0
        %v897 = vadd.f32 %v645, %v896
        %v898 = vpop.f32.mrb[0].mxu0
        %v899 = vadd.f32 %v649, %v898
        %v900 = vpop.f32.mrb[0].mxu0
        %v901 = vadd.f32 %v645, %v900
        %v902 = vpop.f32.mrb[0].mxu0
        %v903 = vadd.f32 %v649, %v902
        %904 = vmatprep.mubr.bf16.mxu0 %v605
        %905 = vmatmul.mubr.bf16.gmra.mrb[0].mxu0 %v604
        %v906 = vpop.f32.mrb[0].mxu0
        %v907 = vadd.f32 %v645, %v906
        %v908 = vpop.f32.mrb[0].mxu0
        %v909 = vadd.f32 %v649, %v908
        %v910 = vpop.f32.mrb[0].mxu0
        %v911 = vadd.f32 %v645, %v910
        %v912 = vpop.f32.mrb[0].mxu0
        %v913 = vadd.f32 %v649, %v912
        %914 = vmatprep.mubr.bf16.mxu0 %v607
        %915 = vmatmul.mubr.bf16.gmra.mrb[0].mxu0 %v606
        %v916 = vpop.f32.mrb[0].mxu0
        %v917 = vadd.f32 %v645, %v916
        %v918 = vpop.f32.mrb[0].mxu0
        %v919 = vadd.f32 %v649, %v918
        %v920 = vpop.f32.mrb[0].mxu0
        %v921 = vadd.f32 %v645, %v920
        %v922 = vpop.f32.mrb[0].mxu0
        %v923 = vadd.f32 %v649, %v922
        %924 = vdwg.mxu0
        %v925 = vmax.f32 %v847, 0.0
        %v926 = vmax.f32 %v849, 0.0
        %v927 = vmax.f32 %v851, 0.0
        %v928 = vmax.f32 %v853, 0.0
        %v929 = vmax.f32 %v857, 0.0
        %v930 = vmax.f32 %v859, 0.0
        %v931 = vmax.f32 %v861, 0.0
        %v932 = vmax.f32 %v863, 0.0
        %v933 = vmax.f32 %v867, 0.0
        %v934 = vmax.f32 %v869, 0.0
        %v935 = vmax.f32 %v871, 0.0
        %v936 = vmax.f32 %v873, 0.0
        %v937 = vmax.f32 %v877, 0.0
        %v938 = vmax.f32 %v879, 0.0
        %v939 = vmax.f32 %v881, 0.0
        %v940 = vmax.f32 %v883, 0.0
        %v941 = vmax.f32 %v887, 0.0
        %v942 = vmax.f32 %v889, 0.0
        %v943 = vmax.f32 %v891, 0.0
        %v944 = vmax.f32 %v893, 0.0
        %v945 = vmax.f32 %v897, 0.0
        %v946 = vmax.f32 %v899, 0.0
        %v947 = vmax.f32 %v901, 0.0
        %v948 = vmax.f32 %v903, 0.0
        %v949 = vmax.f32 %v907, 0.0
        %v950 = vmax.f32 %v909, 0.0
        %v951 = vmax.f32 %v911, 0.0
        %v952 = vmax.f32 %v913, 0.0
        %v953 = vmax.f32 %v917, 0.0
        %v954 = vmax.f32 %v919, 0.0
        %v955 = vmax.f32 %v921, 0.0
        %v956 = vmax.f32 %v923, 0.0
        %v957 = vpack.c.bf16 %v927, %v925
        %v958 = vpack.c.bf16 %v928, %v926
        %v959 = vpack.c.bf16 %v931, %v929
        %v960 = vpack.c.bf16 %v932, %v930
        %v961 = vpack.c.bf16 %v935, %v933
        %v962 = vpack.c.bf16 %v936, %v934
        %v963 = vpack.c.bf16 %v939, %v937
        %v964 = vpack.c.bf16 %v940, %v938
        %v965 = vpack.c.bf16 %v943, %v941
        %v966 = vpack.c.bf16 %v944, %v942
        %v967 = vpack.c.bf16 %v947, %v945
        %v968 = vpack.c.bf16 %v948, %v946
        %v969 = vpack.c.bf16 %v951, %v949
        %v970 = vpack.c.bf16 %v952, %v950
        %v971 = vpack.c.bf16 %v955, %v953
        %v972 = vpack.c.bf16 %v956, %v954
        %v973 = vld [vmem:[#allocation3] sm:$0xff]
        %v974 = vld [vmem:[#allocation3 + $0x8] sm:$0xff]
        %v975 = vld [vmem:[#allocation3 + $0x10] sm:$0xff]
        %v976 = vld [vmem:[#allocation3 + $0x18] sm:$0xff]
        %v977 = vld [vmem:[#allocation3 + $0x20] sm:$0xff]
        %v978 = vld [vmem:[#allocation3 + $0x28] sm:$0xff]
        %v979 = vld [vmem:[#allocation3 + $0x30] sm:$0xff]
        %v980 = vld [vmem:[#allocation3 + $0x38] sm:$0xff]
        %v981 = vld [vmem:[#allocation3 + $0x40] sm:$0xff]
        %v982 = vld [vmem:[#allocation3 + $0x48] sm:$0xff]
        %v983 = vld [vmem:[#allocation3 + $0x50] sm:$0xff]
        %v984 = vld [vmem:[#allocation3 + $0x58] sm:$0xff]
        %v985 = vld [vmem:[#allocation3 + $0x60] sm:$0xff]
        %v986 = vld [vmem:[#allocation3 + $0x68] sm:$0xff]
        %v987 = vld [vmem:[#allocation3 + $0x70] sm:$0xff]
        %v988 = vld [vmem:[#allocation3 + $0x78] sm:$0xff]
        %v989 = vld [vmem:[#allocation3 + $0x80] sm:$0xff]
        %v990 = vld [vmem:[#allocation3 + $0x88] sm:$0xff]
        %v991 = vld [vmem:[#allocation3 + $0x90] sm:$0xff]
        %v992 = vld [vmem:[#allocation3 + $0x98] sm:$0xff]
        %v993 = vld [vmem:[#allocation3 + $0xa0] sm:$0xff]
        %v994 = vld [vmem:[#allocation3 + $0xa8] sm:$0xff]
        %v995 = vld [vmem:[#allocation3 + $0xb0] sm:$0xff]
        %v996 = vld [vmem:[#allocation3 + $0xb8] sm:$0xff]
        %v997 = vld [vmem:[#allocation3 + $0xc0] sm:$0xff]
        %v998 = vld [vmem:[#allocation3 + $0xc8] sm:$0xff]
        %v999 = vld [vmem:[#allocation3 + $0xd0] sm:$0xff]
        %v1000 = vld [vmem:[#allocation3 + $0xd8] sm:$0xff]
        %v1001 = vld [vmem:[#allocation3 + $0xe0] sm:$0xff]
        %v1002 = vld [vmem:[#allocation3 + $0xe8] sm:$0xff]
        %v1003 = vld [vmem:[#allocation3 + $0xf0] sm:$0xff]
        %v1004 = vld [vmem:[#allocation3 + $0xf8] sm:$0xff]
        %v1005 = vld [vmem:[%s6] sm:$0x3]
        %v1007 = vlaneseq
        %v1008 = vshrl.u32 %v1007, 7
        %v1009 = vsub.s32 0, %v1008
        %v1010 = vrot.slane %v1005, %v1009
        %v1011 = vlaneseq
        %v1012 = vshrl.u32 %v1011, 7
        %v1013 = vsub.s32 1, %v1012
        %v1014 = vrot.slane %v1005, %v1013
        %v1049 = vunpack.c.l.b16 %v973
        %v1050 = vunpack.c.h.b16 %v973
        %v1051 = vunpack.c.l.b16 %v974
        %v1052 = vunpack.c.h.b16 %v974
        %v1053 = vunpack.c.l.b16 %v975
        %v1054 = vunpack.c.h.b16 %v975
        %v1055 = vunpack.c.l.b16 %v976
        %v1056 = vunpack.c.h.b16 %v976
        %v1057 = vunpack.c.l.b16 %v977
        %v1058 = vunpack.c.h.b16 %v977
        %v1059 = vunpack.c.l.b16 %v978
        %v1060 = vunpack.c.h.b16 %v978
        %v1061 = vunpack.c.l.b16 %v979
        %v1062 = vunpack.c.h.b16 %v979
        %v1063 = vunpack.c.l.b16 %v980
        %v1064 = vunpack.c.h.b16 %v980
        %v1065 = vunpack.c.l.b16 %v981
        %v1066 = vunpack.c.h.b16 %v981
        %v1067 = vunpack.c.l.b16 %v982
        %v1068 = vunpack.c.h.b16 %v982
        %v1069 = vunpack.c.l.b16 %v983
        %v1070 = vunpack.c.h.b16 %v983
        %v1071 = vunpack.c.l.b16 %v984
        %v1072 = vunpack.c.h.b16 %v984
        %v1073 = vunpack.c.l.b16 %v985
        %v1074 = vunpack.c.h.b16 %v985
        %v1075 = vunpack.c.l.b16 %v986
        %v1076 = vunpack.c.h.b16 %v986
        %v1077 = vunpack.c.l.b16 %v987
        %v1078 = vunpack.c.h.b16 %v987
        %v1079 = vunpack.c.l.b16 %v988
        %v1080 = vunpack.c.h.b16 %v988
        %v1081 = vunpack.c.l.b16 %v989
        %v1082 = vunpack.c.h.b16 %v989
        %v1083 = vunpack.c.l.b16 %v990
        %v1084 = vunpack.c.h.b16 %v990
        %v1085 = vunpack.c.l.b16 %v991
        %v1086 = vunpack.c.h.b16 %v991
        %v1087 = vunpack.c.l.b16 %v992
        %v1088 = vunpack.c.h.b16 %v992
        %v1089 = vunpack.c.l.b16 %v993
        %v1090 = vunpack.c.h.b16 %v993
        %v1091 = vunpack.c.l.b16 %v994
        %v1092 = vunpack.c.h.b16 %v994
        %v1093 = vunpack.c.l.b16 %v995
        %v1094 = vunpack.c.h.b16 %v995
        %v1095 = vunpack.c.l.b16 %v996
        %v1096 = vunpack.c.h.b16 %v996
        %v1097 = vunpack.c.l.b16 %v997
        %v1098 = vunpack.c.h.b16 %v997
        %v1099 = vunpack.c.l.b16 %v998
        %v1100 = vunpack.c.h.b16 %v998
        %v1101 = vunpack.c.l.b16 %v999
        %v1102 = vunpack.c.h.b16 %v999
        %v1103 = vunpack.c.l.b16 %v1000
        %v1104 = vunpack.c.h.b16 %v1000
        %v1105 = vunpack.c.l.b16 %v1001
        %v1106 = vunpack.c.h.b16 %v1001
        %v1107 = vunpack.c.l.b16 %v1002
        %v1108 = vunpack.c.h.b16 %v1002
        %v1109 = vunpack.c.l.b16 %v1003
        %v1110 = vunpack.c.h.b16 %v1003
        %v1111 = vunpack.c.l.b16 %v1004
        %v1112 = vunpack.c.h.b16 %v1004
        %v1113 = vpack.c.b16 %v1051, %v1049
        %v1114 = vpack.c.b16 %v1052, %v1050
        %v1115 = vpack.c.b16 %v1055, %v1053
        %v1116 = vpack.c.b16 %v1056, %v1054
        %v1117 = vpack.c.b16 %v1059, %v1057
        %v1118 = vpack.c.b16 %v1060, %v1058
        %v1119 = vpack.c.b16 %v1063, %v1061
        %v1120 = vpack.c.b16 %v1064, %v1062
        %v1121 = vpack.c.b16 %v1067, %v1065
        %v1122 = vpack.c.b16 %v1068, %v1066
        %v1123 = vpack.c.b16 %v1071, %v1069
        %v1124 = vpack.c.b16 %v1072, %v1070
        %v1125 = vpack.c.b16 %v1075, %v1073
        %v1126 = vpack.c.b16 %v1076, %v1074
        %v1127 = vpack.c.b16 %v1079, %v1077
        %v1128 = vpack.c.b16 %v1080, %v1078
        %v1129 = vpack.c.b16 %v1083, %v1081
        %v1130 = vpack.c.b16 %v1084, %v1082
        %v1131 = vpack.c.b16 %v1087, %v1085
        %v1132 = vpack.c.b16 %v1088, %v1086
        %v1133 = vpack.c.b16 %v1091, %v1089
        %v1134 = vpack.c.b16 %v1092, %v1090
        %v1135 = vpack.c.b16 %v1095, %v1093
        %v1136 = vpack.c.b16 %v1096, %v1094
        %v1137 = vpack.c.b16 %v1099, %v1097
        %v1138 = vpack.c.b16 %v1100, %v1098
        %v1139 = vpack.c.b16 %v1103, %v1101
        %v1140 = vpack.c.b16 %v1104, %v1102
        %v1141 = vpack.c.b16 %v1107, %v1105
        %v1142 = vpack.c.b16 %v1108, %v1106
        %v1143 = vpack.c.b16 %v1111, %v1109
        %v1144 = vpack.c.b16 %v1112, %v1110
        %1177 = vmatprep.subr.bf16.mxu0 %v1114
        %1178 = vmatpush1.bf16.msra.mxu0 %v1113
        %1179 = vmatprep.subr.bf16.mxu0 %v1116
        %1180 = vmatpush1.bf16.msra.mxu0 %v1115
        %1181 = vmatprep.subr.bf16.mxu0 %v1118
        %1182 = vmatpush1.bf16.msra.mxu0 %v1117
        %1183 = vmatprep.subr.bf16.mxu0 %v1120
        %1184 = vmatpush1.bf16.msra.mxu0 %v1119
        %1185 = vmatprep.subr.bf16.mxu0 %v1122
        %1186 = vmatpush1.bf16.msra.mxu0 %v1121
        %1187 = vmatprep.subr.bf16.mxu0 %v1124
        %1188 = vmatpush1.bf16.msra.mxu0 %v1123
        %1189 = vmatprep.subr.bf16.mxu0 %v1126
        %1190 = vmatpush1.bf16.msra.mxu0 %v1125
        %1191 = vmatprep.subr.bf16.mxu0 %v1128
        %1192 = vmatpush1.bf16.msra.mxu0 %v1127
        %1193 = vmatprep.subr.bf16.mxu0 %v1130
        %1194 = vmatpush1.bf16.msra.mxu0 %v1129
        %1195 = vmatprep.subr.bf16.mxu0 %v1132
        %1196 = vmatpush1.bf16.msra.mxu0 %v1131
        %1197 = vmatprep.subr.bf16.mxu0 %v1134
        %1198 = vmatpush1.bf16.msra.mxu0 %v1133
        %1199 = vmatprep.subr.bf16.mxu0 %v1136
        %1200 = vmatpush1.bf16.msra.mxu0 %v1135
        %1201 = vmatprep.subr.bf16.mxu0 %v1138
        %1202 = vmatpush1.bf16.msra.mxu0 %v1137
        %1203 = vmatprep.subr.bf16.mxu0 %v1140
        %1204 = vmatpush1.bf16.msra.mxu0 %v1139
        %1205 = vmatprep.subr.bf16.mxu0 %v1142
        %1206 = vmatpush1.bf16.msra.mxu0 %v1141
        %1207 = vmatprep.subr.bf16.mxu0 %v1144
        %1208 = vmatpush1.bf16.msra.mxu0 %v1143
        %1209 = vmatprep.mubr.bf16.mxu0 %v958
        %1210 = vmatmul.mubr.bf16.gmra.mrb[0].mxu0 %v957
        %v1211 = vpop.f32.mrb[0].mxu0
        %v1212 = vadd.f32 %v1010, %v1211
        %v1213 = vpop.f32.mrb[0].mxu0
        %v1214 = vadd.f32 %v1014, %v1213
        %v1215 = vpop.f32.mrb[0].mxu0
        %v1216 = vadd.f32 %v1010, %v1215
        %v1217 = vpop.f32.mrb[0].mxu0
        %v1218 = vadd.f32 %v1014, %v1217
        %1219 = vmatprep.mubr.bf16.mxu0 %v960
        %1220 = vmatmul.mubr.bf16.gmra.mrb[0].mxu0 %v959
        %v1221 = vpop.f32.mrb[0].mxu0
        %v1222 = vadd.f32 %v1010, %v1221
        %v1223 = vpop.f32.mrb[0].mxu0
        %v1224 = vadd.f32 %v1014, %v1223
        %v1225 = vpop.f32.mrb[0].mxu0
        %v1226 = vadd.f32 %v1010, %v1225
        %v1227 = vpop.f32.mrb[0].mxu0
        %v1228 = vadd.f32 %v1014, %v1227
        %1229 = vmatprep.mubr.bf16.mxu0 %v962
        %1230 = vmatmul.mubr.bf16.gmra.mrb[0].mxu0 %v961
        %v1231 = vpop.f32.mrb[0].mxu0
        %v1232 = vadd.f32 %v1010, %v1231
        %v1233 = vpop.f32.mrb[0].mxu0
        %v1234 = vadd.f32 %v1014, %v1233
        %v1235 = vpop.f32.mrb[0].mxu0
        %v1236 = vadd.f32 %v1010, %v1235
        %v1237 = vpop.f32.mrb[0].mxu0
        %v1238 = vadd.f32 %v1014, %v1237
        %1239 = vmatprep.mubr.bf16.mxu0 %v964
        %1240 = vmatmul.mubr.bf16.gmra.mrb[0].mxu0 %v963
        %v1241 = vpop.f32.mrb[0].mxu0
        %v1242 = vadd.f32 %v1010, %v1241
        %v1243 = vpop.f32.mrb[0].mxu0
        %v1244 = vadd.f32 %v1014, %v1243
        %v1245 = vpop.f32.mrb[0].mxu0
        %v1246 = vadd.f32 %v1010, %v1245
        %v1247 = vpop.f32.mrb[0].mxu0
        %v1248 = vadd.f32 %v1014, %v1247
        %1249 = vmatprep.mubr.bf16.mxu0 %v966
        %1250 = vmatmul.mubr.bf16.gmra.mrb[0].mxu0 %v965
        %v1251 = vpop.f32.mrb[0].mxu0
        %v1252 = vadd.f32 %v1010, %v1251
        %v1253 = vpop.f32.mrb[0].mxu0
        %v1254 = vadd.f32 %v1014, %v1253
        %v1255 = vpop.f32.mrb[0].mxu0
        %v1256 = vadd.f32 %v1010, %v1255
        %v1257 = vpop.f32.mrb[0].mxu0
        %v1258 = vadd.f32 %v1014, %v1257
        %1259 = vmatprep.mubr.bf16.mxu0 %v968
        %1260 = vmatmul.mubr.bf16.gmra.mrb[0].mxu0 %v967
        %v1261 = vpop.f32.mrb[0].mxu0
        %v1262 = vadd.f32 %v1010, %v1261
        %v1263 = vpop.f32.mrb[0].mxu0
        %v1264 = vadd.f32 %v1014, %v1263
        %v1265 = vpop.f32.mrb[0].mxu0
        %v1266 = vadd.f32 %v1010, %v1265
        %v1267 = vpop.f32.mrb[0].mxu0
        %v1268 = vadd.f32 %v1014, %v1267
        %1269 = vmatprep.mubr.bf16.mxu0 %v970
        %1270 = vmatmul.mubr.bf16.gmra.mrb[0].mxu0 %v969
        %v1271 = vpop.f32.mrb[0].mxu0
        %v1272 = vadd.f32 %v1010, %v1271
        %v1273 = vpop.f32.mrb[0].mxu0
        %v1274 = vadd.f32 %v1014, %v1273
        %v1275 = vpop.f32.mrb[0].mxu0
        %v1276 = vadd.f32 %v1010, %v1275
        %v1277 = vpop.f32.mrb[0].mxu0
        %v1278 = vadd.f32 %v1014, %v1277
        %1279 = vmatprep.mubr.bf16.mxu0 %v972
        %1280 = vmatmul.mubr.bf16.gmra.mrb[0].mxu0 %v971
        %v1281 = vpop.f32.mrb[0].mxu0
        %v1282 = vadd.f32 %v1010, %v1281
        %v1283 = vpop.f32.mrb[0].mxu0
        %v1284 = vadd.f32 %v1014, %v1283
        %v1285 = vpop.f32.mrb[0].mxu0
        %v1286 = vadd.f32 %v1010, %v1285
        %v1287 = vpop.f32.mrb[0].mxu0
        %v1288 = vadd.f32 %v1014, %v1287
        %1289 = vdwg.mxu0
        %v1290 = vmax.f32 %v1212, 0.0
        %v1291 = vmax.f32 %v1214, 0.0
        %v1292 = vmax.f32 %v1216, 0.0
        %v1293 = vmax.f32 %v1218, 0.0
        %v1294 = vmax.f32 %v1222, 0.0
        %v1295 = vmax.f32 %v1224, 0.0
        %v1296 = vmax.f32 %v1226, 0.0
        %v1297 = vmax.f32 %v1228, 0.0
        %v1298 = vmax.f32 %v1232, 0.0
        %v1299 = vmax.f32 %v1234, 0.0
        %v1300 = vmax.f32 %v1236, 0.0
        %v1301 = vmax.f32 %v1238, 0.0
        %v1302 = vmax.f32 %v1242, 0.0
        %v1303 = vmax.f32 %v1244, 0.0
        %v1304 = vmax.f32 %v1246, 0.0
        %v1305 = vmax.f32 %v1248, 0.0
        %v1306 = vmax.f32 %v1252, 0.0
        %v1307 = vmax.f32 %v1254, 0.0
        %v1308 = vmax.f32 %v1256, 0.0
        %v1309 = vmax.f32 %v1258, 0.0
        %v1310 = vmax.f32 %v1262, 0.0
        %v1311 = vmax.f32 %v1264, 0.0
        %v1312 = vmax.f32 %v1266, 0.0
        %v1313 = vmax.f32 %v1268, 0.0
        %v1314 = vmax.f32 %v1272, 0.0
        %v1315 = vmax.f32 %v1274, 0.0
        %v1316 = vmax.f32 %v1276, 0.0
        %v1317 = vmax.f32 %v1278, 0.0
        %v1318 = vmax.f32 %v1282, 0.0
        %v1319 = vmax.f32 %v1284, 0.0
        %v1320 = vmax.f32 %v1286, 0.0
        %v1321 = vmax.f32 %v1288, 0.0
        %v1322 = vld [vmem:[%s7] sm:$0x3]
        %v1324 = vlaneseq
        %v1325 = vshrl.u32 %v1324, 7
        %v1326 = vsub.s32 0, %v1325
        %v1327 = vrot.slane %v1322, %v1326
        %v1328 = vlaneseq
        %v1329 = vshrl.u32 %v1328, 7
        %v1330 = vsub.s32 1, %v1329
        %v1331 = vrot.slane %v1322, %v1330
        %v1334 = vmul.f32 %v1290, %v1327
        %v1335 = vmul.f32 %v1291, %v1331
        %v1336 = vmul.f32 %v1292, %v1327
        %v1337 = vmul.f32 %v1293, %v1331
        %v1338 = vmul.f32 %v1294, %v1327
        %v1339 = vmul.f32 %v1295, %v1331
        %v1340 = vmul.f32 %v1296, %v1327
        %v1341 = vmul.f32 %v1297, %v1331
        %v1342 = vmul.f32 %v1298, %v1327
        %v1343 = vmul.f32 %v1299, %v1331
        %v1344 = vmul.f32 %v1300, %v1327
        %v1345 = vmul.f32 %v1301, %v1331
        %v1346 = vmul.f32 %v1302, %v1327
        %v1347 = vmul.f32 %v1303, %v1331
        %v1348 = vmul.f32 %v1304, %v1327
        %v1349 = vmul.f32 %v1305, %v1331
        %v1350 = vmul.f32 %v1306, %v1327
        %v1351 = vmul.f32 %v1307, %v1331
        %v1352 = vmul.f32 %v1308, %v1327
        %v1353 = vmul.f32 %v1309, %v1331
        %v1354 = vmul.f32 %v1310, %v1327
        %v1355 = vmul.f32 %v1311, %v1331
        %v1356 = vmul.f32 %v1312, %v1327
        %v1357 = vmul.f32 %v1313, %v1331
        %v1358 = vmul.f32 %v1314, %v1327
        %v1359 = vmul.f32 %v1315, %v1331
        %v1360 = vmul.f32 %v1316, %v1327
        %v1361 = vmul.f32 %v1317, %v1331
        %v1362 = vmul.f32 %v1318, %v1327
        %v1363 = vmul.f32 %v1319, %v1331
        %v1364 = vmul.f32 %v1320, %v1327
        %v1365 = vmul.f32 %v1321, %v1331
        %v1366 = vadd.f32 %v1334, %v1335
        %1367 = vadd.xlane.f32.xlu0 %v1366
        %v1368 = vpop.xlane.xlu0 %1367
        %v1369 = vadd.f32 %v1336, %v1337
        %1370 = vadd.xlane.f32.xlu0 %v1369
        %v1371 = vpop.xlane.xlu0 %1370
        %v1372 = vadd.f32 %v1338, %v1339
        %1373 = vadd.xlane.f32.xlu0 %v1372
        %v1374 = vpop.xlane.xlu0 %1373
        %v1375 = vadd.f32 %v1340, %v1341
        %1376 = vadd.xlane.f32.xlu0 %v1375
        %v1377 = vpop.xlane.xlu0 %1376
        %v1378 = vadd.f32 %v1342, %v1343
        %1379 = vadd.xlane.f32.xlu0 %v1378
        %v1380 = vpop.xlane.xlu0 %1379
        %v1381 = vadd.f32 %v1344, %v1345
        %1382 = vadd.xlane.f32.xlu0 %v1381
        %v1383 = vpop.xlane.xlu0 %1382
        %v1384 = vadd.f32 %v1346, %v1347
        %1385 = vadd.xlane.f32.xlu0 %v1384
        %v1386 = vpop.xlane.xlu0 %1385
        %v1387 = vadd.f32 %v1348, %v1349
        %1388 = vadd.xlane.f32.xlu0 %v1387
        %v1389 = vpop.xlane.xlu0 %1388
        %v1390 = vadd.f32 %v1350, %v1351
        %1391 = vadd.xlane.f32.xlu0 %v1390
        %v1392 = vpop.xlane.xlu0 %1391
        %v1393 = vadd.f32 %v1352, %v1353
        %1394 = vadd.xlane.f32.xlu0 %v1393
        %v1395 = vpop.xlane.xlu0 %1394
        %v1396 = vadd.f32 %v1354, %v1355
        %1397 = vadd.xlane.f32.xlu0 %v1396
        %v1398 = vpop.xlane.xlu0 %1397
        %v1399 = vadd.f32 %v1356, %v1357
        %1400 = vadd.xlane.f32.xlu0 %v1399
        %v1401 = vpop.xlane.xlu0 %1400
        %v1402 = vadd.f32 %v1358, %v1359
        %1403 = vadd.xlane.f32.xlu0 %v1402
        %v1404 = vpop.xlane.xlu0 %1403
        %v1405 = vadd.f32 %v1360, %v1361
        %1406 = vadd.xlane.f32.xlu0 %v1405
        %v1407 = vpop.xlane.xlu0 %1406
        %v1408 = vadd.f32 %v1362, %v1363
        %1409 = vadd.xlane.f32.xlu0 %v1408
        %v1410 = vpop.xlane.xlu0 %1409
        %v1411 = vadd.f32 %v1364, %v1365
        %1412 = vadd.xlane.f32.xlu0 %v1411
        %v1413 = vpop.xlane.xlu0 %1412
        %s1414 = sld [smem:[#allocation2]]
        %v1415 = vstv %s1414
        %v1416 = vadd.f32 %v1368, %v1415
        %v1417 = vadd.f32 %v1371, %v1415
        %v1418 = vadd.f32 %v1374, %v1415
        %v1419 = vadd.f32 %v1377, %v1415
        %v1420 = vadd.f32 %v1380, %v1415
        %v1421 = vadd.f32 %v1383, %v1415
        %v1422 = vadd.f32 %v1386, %v1415
        %v1423 = vadd.f32 %v1389, %v1415
        %v1424 = vadd.f32 %v1392, %v1415
        %v1425 = vadd.f32 %v1395, %v1415
        %v1426 = vadd.f32 %v1398, %v1415
        %v1427 = vadd.f32 %v1401, %v1415
        %v1428 = vadd.f32 %v1404, %v1415
        %v1429 = vadd.f32 %v1407, %v1415
        %v1430 = vadd.f32 %v1410, %v1415
        %v1431 = vadd.f32 %v1413, %v1415
        %1432 = vxpose.xlu0.b32.start [1/16] %v1416, 128
        %1433 = vxpose.xlu0.b32.cont [2/16] %v1417, 128
        %1434 = vxpose.xlu0.b32.cont [3/16] %v1418, 128
        %1435 = vxpose.xlu0.b32.cont [4/16] %v1419, 128
        %1436 = vxpose.xlu0.b32.cont [5/16] %v1420, 128
        %1437 = vxpose.xlu0.b32.cont [6/16] %v1421, 128
        %1438 = vxpose.xlu0.b32.cont [7/16] %v1422, 128
        %1439 = vxpose.xlu0.b32.cont [8/16] %v1423, 128
        %1440 = vxpose.xlu0.b32.cont [9/16] %v1424, 128
        %1441 = vxpose.xlu0.b32.cont [10/16] %v1425, 128
        %1442 = vxpose.xlu0.b32.cont [11/16] %v1426, 128
        %1443 = vxpose.xlu0.b32.cont [12/16] %v1427, 128
        %1444 = vxpose.xlu0.b32.cont [13/16] %v1428, 128
        %1445 = vxpose.xlu0.b32.cont [14/16] %v1429, 128
        %1446 = vxpose.xlu0.b32.cont [15/16] %v1430, 128
        %1447 = vxpose.xlu0.b32.end [16/16] %v1431, 128
        %v1448 = vpop.trf.xlu0
        %v1449 = vpop.trf.xlu0
        %v1450 = vpop.trf.xlu0
        %v1451 = vpop.trf.xlu0
        %v1452 = vpop.trf.xlu0
        %v1453 = vpop.trf.xlu0
        %v1454 = vpop.trf.xlu0
        %v1455 = vpop.trf.xlu0
        %v1456 = vpop.trf.xlu0
        %v1457 = vpop.trf.xlu0
        %v1458 = vpop.trf.xlu0
        %v1459 = vpop.trf.xlu0
        %v1460 = vpop.trf.xlu0
        %v1461 = vpop.trf.xlu0
        %v1462 = vpop.trf.xlu0
        %v1463 = vpop.trf.xlu0
        %1464 = vst [vmem:[%s341] sm:$0x1] %v1448
        %s1465 = sand.u32 %s227, 1
        %s1466 = scalar_lea.sflag [#allocation5], %s1465
        %s1467 = sand.u32 %s227, 1
        %s1468 = scalar_lea.vmem [#allocation6], %s1467
        // Predicated region
        $region61: #{soft_q_forward.1} parent=55 // pred_check
          %p1469 = pneg %p237
        $region62: #{soft_q_forward.1} parent=55 // pred_check_branch
          %1471 = sbr.rel (%p1469) target = $region64
        $region63: #{soft_q_forward.1} parent=55 // pred_region
          %s1473 = ssub.s32 16, 16
          %1474 = vsyncadd %s1466, %s1473
          %s1475 = smul.addr %s25, 16
          %s1476 = scalar_lea.hbm %s9, %s1475
          %s1478 = sshll.u32 %s1468, 4
          %s1479 = int_to_ptr.vmem [resolvable:$true] %s1478
          %1481 = dma.vmem_to_hbm [thread:$0]  %s1479, 16, %s1476, %s1466
        $region64: #{soft_q_forward.1} parent=55 // pred_fallthru
          _
      $region56: #{soft_q_forward.1} parent=5 // pred_fallthru
        _
      %p1482 = scmp.le.s32.totalorder 2, %s20
      // Predicated region
      $region65: #{soft_q_forward.1} parent=5 // pred_check
        %p1483 = pneg %p1482
      $region66: #{soft_q_forward.1} parent=5 // pred_check_branch
        %1485 = sbr.rel (%p1483) target = $region68
      $region67: #{soft_q_forward.1} parent=5 // pred_region
        %s1486 = ssub.s32 %s20, 2
        // Predicated region
        $region69: #{soft_q_forward.1} parent=67 // pred_check
          %p1487 = pneg %p243
        $region70: #{soft_q_forward.1} parent=67 // pred_check_branch
          %1489 = sbr.rel (%p1487) target = $region72
        $region71: #{soft_q_forward.1} parent=67 // pred_region
          %s1490 = sand.u32 %s228, 1
          %s1491 = scalar_lea.sflag [#allocation5], %s1490
          %s1492 = sand.u32 %s228, 1
          %s1493 = scalar_lea.vmem [#allocation6], %s1492
          %1494 = dma.done %s1491, 16
        $region72: #{soft_q_forward.1} parent=67 // pred_fallthru
          _
      $region68: #{soft_q_forward.1} parent=5 // pred_fallthru
        _
    $region6: #{soft_q_forward.1} parent=1 // loop_footer
      %s24 = sadd.s32 1, %s20
    $region7: #{soft_q_forward.1} parent=1 // loop_footer_branch
      %19 = sbr.rel target = $region3
    $region8: #{soft_q_forward.1} parent=1 // loop_exit
      _
    %1495 = vsyncpa [#allocation4], 1
    %s1496 = scalar_lea.sflag [#allocation4], 1
    %1497 = vsyncpa %s1496, 1
    %1498 = vsyncpa [#allocation5], 1
    %s1499 = scalar_lea.sflag [#allocation5], 1
    %1500 = vsyncpa %s1499, 1

</llo_original>
